<compile_context>
chip_gen: v5e
topology: v5e:2x2
jax: 0.10.0
libtpu: 0.0.40
codegen_flags: <defaults>
</compile_context>

<pallas_src>
import math
import numpy as np
import jax
import jax.numpy as jnp
from jax import lax
from jax.experimental import pallas as pl
from jax.experimental.pallas import tpu as pltpu

LANE = 128                      # TPU lane width (last dim of every block)
DEG_CHUNK = 2                   # neighbours processed per inner grid step
VMEM_LIMIT = 32 * 1024 * 1024   # explicit scoped-VMEM budget (fits v5e/v6e/v7x)


def _round_up(n, m):
    return ((n + m - 1) // m) * m


def _hash_u32(x):
    """lowbias32 integer finalizer: mul/xor/shift only (VPU, no EUP/MXU)."""
    x = x ^ (x >> 16)
    x = x * jnp.uint32(0x7FEB352D)
    x = x ^ (x >> 15)
    x = x * jnp.uint32(0x846CA68B)
    x = x ^ (x >> 16)
    return x


# -----------------------------------------------------------------------------
# Kernel 1: neighbour masking + aggregation + fused support matmul.
# Grid: (node-row tiles [parallel], degree chunks [arbitrary, innermost]).
# -----------------------------------------------------------------------------
def _make_mask_support_kernel(deg_chunk, drop_rate, emit_keep):
    keep_prob = 1.0 - drop_rate
    inv_keep = 0.0 if keep_prob <= 0.0 else 1.0 / keep_prob
    # 31-bit threshold (both compare operands < 2^31 so signed/unsigned agree).
    # NOTE: clamps at 2^31-1, so keep_prob within ~2^-31 of 1.0 is very
    # slightly biased; irrelevant at p=0.5.
    thr31 = min(int(round(keep_prob * float(2 ** 31))), 2 ** 31 - 1)

    def kernel(seed_ref, x_ref, nbr_ref, wmc_ref, wmn_ref, w0_ref, sup_ref, *rest):
        # seed_ref : (1,) int32 SMEM
        # x_ref    : (TILE_N, Fp) f32      centre node features
        # nbr_ref  : (Dc, TILE_N, Fp) bf16 neighbour chunk (zero-sentinel pads)
        # wmc_ref  : (Fp, Fp) bf16         weights_mask0[:F]  (centre half)
        # wmn_ref  : (Fp, Fp) bf16         weights_mask0[F:]  (neighbour half)
        # w0_ref   : (Fp, Op) bf16         weight_0
        # sup_ref  : (TILE_N, Op) bf16     output: input_new @ weight_0
        if emit_keep:
            keep_ref, base_ref, agg_ref = rest
        else:
            base_ref, agg_ref = rest
        tile_n, fp = x_ref.shape
        i = pl.program_id(0)            # node-row tile  (parallel)
        c = pl.program_id(1)            # degree chunk   (arbitrary, innermost)

        @pl.when(c == 0)
        def _():
            # centre-half matmul, shared by every degree chunk of this tile.
            base_ref[...] = jnp.dot(x_ref[...].astype(jnp.bfloat16), wmc_ref[...],
                                    preferred_element_type=jnp.float32)
            agg_ref[...] = x_ref[...]

        nbr = nbr_ref[...]                                    # (Dc, TILE_N, Fp)
        # [x_i || x_j] @ W_mask == x_i @ W_c + x_j @ W_n  (cen tensor never built);
        # one (Dc*TILE_N, Fp) x (Fp, Fp) MXU call per chunk.
        logits = jnp.dot(nbr.reshape(deg_chunk * tile_n, fp), wmn_ref[...],
                         preferred_element_type=jnp.float32)
        logits = logits.reshape(deg_chunk, tile_n, fp) + base_ref[...][None, :, :]
        # sigmoid(x) = 0.5*tanh(0.5x) + 0.5 : one EUP push per vreg (vs exp+recip).
        m = 0.5 * jnp.tanh(0.5 * logits) + 0.5

        if drop_rate > 0.0:
            # Counter-based dropout: hash of (seed, global d, global row, col).
            shape = (deg_chunk, tile_n, fp)
            d_ix = (lax.broadcasted_iota(jnp.uint32, shape, 0)
                    + (c * deg_chunk).astype(jnp.uint32))
            r_ix = (lax.broadcasted_iota(jnp.uint32, shape, 1)
                    + (i * tile_n).astype(jnp.uint32))
            f_ix = lax.broadcasted_iota(jnp.uint32, shape, 2)
            key = ((d_ix * jnp.uint32(0x9E3779B1))
                   ^ (r_ix * jnp.uint32(0x85EBCA77))
                   ^ (f_ix * jnp.uint32(0xC2B2AE3D))
                   ^ seed_ref[0].astype(jnp.uint32))
            bits31 = _hash_u32(key) >> 1                      # uniform [0, 2^31)
            keep_b = bits31 < jnp.uint32(thr31)
            # Fused inverted dropout: single select, no keep->f32 cast / extra mul.
            m = jnp.where(keep_b, m * inv_keep, 0.0)
            if emit_keep:                                     # debug/verification
                keep_ref[...] = keep_b.astype(jnp.float32)
        elif emit_keep:
            keep_ref[...] = jnp.ones((deg_chunk, tile_n, fp), jnp.float32)

        # Zero-sentinel padded neighbour rows contribute exactly 0.
        agg_ref[...] += jnp.sum(m * nbr.astype(jnp.float32), axis=0)

        @pl.when(c == pl.num_programs(1) - 1)
        def _():
            # Fused support matmul: input_new never round-trips through HBM.
            sup_ref[...] = jnp.dot(agg_ref[...].astype(jnp.bfloat16), w0_ref[...],
                                   preferred_element_type=jnp.float32
                                   ).astype(sup_ref.dtype)

    return kernel


def _mask_support_call(x_pad, nbr, wm_c, wm_n, w0_pad, seed_arr, *,
                       tile_n, deg_chunk, drop_rate, emit_keep):
    n_rows, fp = x_pad.shape
    d_pad = nbr.shape[0]
    op = w0_pad.shape[1]
    grid = (n_rows // tile_n, d_pad // deg_chunk)

    out_shape = jax.ShapeDtypeStruct((n_rows, op), jnp.bfloat16)
    out_specs = pl.BlockSpec((tile_n, op), lambda i, c: (i, 0))
    if emit_keep:
        out_shape = (out_shape,
                     jax.ShapeDtypeStruct((d_pad, n_rows, fp), jnp.float32))
        out_specs = (out_specs,
                     pl.BlockSpec((deg_chunk, tile_n, fp), lambda i, c: (c, i, 0)))

    return pl.pallas_call(
        _make_mask_support_kernel(deg_chunk, drop_rate, emit_keep),
        out_shape=out_shape,
        grid=grid,
        in_specs=[
            pl.BlockSpec(memory_space=pltpu.MemorySpace.SMEM),        # seed
            pl.BlockSpec((tile_n, fp), lambda i, c: (i, 0)),          # x tile
            pl.BlockSpec((deg_chunk, tile_n, fp), lambda i, c: (c, i, 0)),  # nbr
            pl.BlockSpec((fp, fp), lambda i, c: (0, 0)),              # W_c
            pl.BlockSpec((fp, fp), lambda i, c: (0, 0)),              # W_n
            pl.BlockSpec((fp, op), lambda i, c: (0, 0)),              # weight_0
        ],
        out_specs=out_specs,
        scratch_shapes=[pltpu.VMEM((tile_n, fp), jnp.float32),        # x @ W_c
                        pltpu.VMEM((tile_n, fp), jnp.float32)],       # agg
        compiler_params=pltpu.CompilerParams(
            dimension_semantics=("parallel", "arbitrary"),
            vmem_limit_bytes=VMEM_LIMIT),
    )(seed_arr, x_pad, nbr, wm_c, wm_n, w0_pad)


# -----------------------------------------------------------------------------
# Kernel 2: out = adj @ support, standard tiled accumulator matmul (bf16 in,
# f32 accumulate/out).
# -----------------------------------------------------------------------------
def _adj_matmul_kernel(adj_ref, sup_ref, out_ref, acc_ref):
    @pl.when(pl.program_id(2) == 0)
    def _():
        acc_ref[...] = jnp.zeros_like(acc_ref)

    acc_ref[...] += jnp.dot(adj_ref[...], sup_ref[...],
                            preferred_element_type=jnp.float32)

    @pl.when(pl.program_id(2) == pl.num_programs(2) - 1)
    def _():
        out_ref[...] = acc_ref[...].astype(out_ref.dtype)


def _adj_matmul(adj_pad, support, *, tm, tn, tk):
    m, k = adj_pad.shape
    _, n = support.shape
    grid = (m // tm, n // tn, k // tk)
    return pl.pallas_call(
        _adj_matmul_kernel,
        out_shape=jax.ShapeDtypeStruct((m, n), jnp.float32),
        grid=grid,
        in_specs=[pl.BlockSpec((tm, tk), lambda i, j, kk: (i, kk)),
                  pl.BlockSpec((tk, tn), lambda i, j, kk: (kk, j))],
        out_specs=pl.BlockSpec((tm, tn), lambda i, j, kk: (i, j)),
        scratch_shapes=[pltpu.VMEM((tm, tn), jnp.float32)],
        compiler_params=pltpu.CompilerParams(
            dimension_semantics=("parallel", "parallel", "arbitrary"),
            vmem_limit_bytes=VMEM_LIMIT),
    )(adj_pad, support)


def _pick_adj_tiles(n_rows, op):
    # 256-cubes fill the v6e/v7x 256x256 MXU and amortize grid-step overhead;
    # fall back to 128 so parallel grid extents stay >= 2 on small graphs (v7x).
    tm = 256 if (n_rows % 256 == 0 and n_rows >= 512) else 128
    tn = 256 if op % 256 == 0 else 128
    return tm, tn, tm


# -----------------------------------------------------------------------------
# Host-side glue: padding + neighbour-table construction.
# -----------------------------------------------------------------------------
def _prepare_inputs(x, adj, add_all, w_mask, w0, tile_n, deg_chunk):
    n, f = x.shape
    o = w0.shape[1]
    d = max(1, max((len(a) for a in add_all), default=1))
    d_pad = _round_up(d, deg_chunk)
    fp = _round_up(f, LANE)
    op = _round_up(o, LANE)
    n_rows = _round_up(n, tile_n)

    x_pad = jnp.zeros((n_rows, fp), jnp.float32).at[:n, :f].set(
        jnp.asarray(x, jnp.float32))
    adj_pad = jnp.zeros((n_rows, n_rows), jnp.bfloat16).at[:n, :n].set(
        jnp.asarray(adj, jnp.bfloat16))

    # Neighbour index table padded with a zero-sentinel row (index n_rows):
    # padded slots gather an all-zero feature row and contribute exactly 0.
    idx = np.full((n_rows, d_pad), n_rows, dtype=np.int32)
    for i, nbrs in enumerate(add_all):
        if len(nbrs):
            idx[i, :len(nbrs)] = np.asarray(nbrs, dtype=np.int32)
    gather_src = jnp.concatenate([x_pad, jnp.zeros((1, fp), jnp.float32)], axis=0)
    nbr = jnp.take(gather_src, jnp.asarray(idx.reshape(-1)), axis=0)
    nbr = nbr.reshape(n_rows, d_pad, fp).transpose(1, 0, 2).astype(jnp.bfloat16)
    # TODO(synk): for graphs where N_pad*Fp fits VMEM, an in-kernel gather via a
    # scalar-prefetched index table would avoid the D-fold HBM re-read here.

    wm_c = (jnp.zeros((fp, fp), jnp.float32).at[:f, :f].set(w_mask[:f, :])
            .astype(jnp.bfloat16))
    wm_n = (jnp.zeros((fp, fp), jnp.float32).at[:f, :f].set(w_mask[f:, :])
            .astype(jnp.bfloat16))
    w0_pad = (jnp.zeros((fp, op), jnp.float32).at[:f, :o].set(w0)
              .astype(jnp.bfloat16))
    return x_pad, adj_pad, nbr, wm_c, wm_n, w0_pad


def gcnmask_forward(x, adj, add_all, w_mask, w0, *, seed=0, drop_rate=0.5,
                    tile_n=None, emit_keep=False):
    """Forward pass of gcnmask (bias=False, training-mode dropout)."""
    n, _ = x.shape
    o = w0.shape[1]
    if tile_n is None:
        # keep >= 2 row tiles so both v7x TensorCores are busy on the parallel axis
        tile_n = 256 if n >= 512 else 128
    x_pad, adj_pad, nbr, wm_c, wm_n, w0_pad = _prepare_inputs(
        x, adj, add_all, w_mask, w0, tile_n, DEG_CHUNK)
    seed_arr = jnp.asarray([seed], dtype=jnp.int32)

    res = _mask_support_call(x_pad, nbr, wm_c, wm_n, w0_pad, seed_arr,
                             tile_n=tile_n, deg_chunk=DEG_CHUNK,
                             drop_rate=drop_rate, emit_keep=emit_keep)
    support = res[0] if emit_keep else res                    # (Np, Op) bf16

    n_rows, op = support.shape
    tm, tn, tk = _pick_adj_tiles(n_rows, op)
    out_pad = _adj_matmul(adj_pad, support, tm=tm, tn=tn, tk=tk)
    out = out_pad[:n, :o]
    # TODO(synk): optional bias add not implemented (module default bias=False).
    if emit_keep:
        return out, res[1]
    return out


# -----------------------------------------------------------------------------
# References for verification (float64 numpy; independent of kernel code).
# -----------------------------------------------------------------------------
def _to_f64(a):
    return np.asarray(jnp.asarray(a, jnp.float32), dtype=np.float64)


def reference_forward_no_dropout(x, adj, add_all, w_mask, w0):
    """Independent numpy reference mirroring the torch per-node loop (p=0)."""
    x = np.asarray(x, np.float64); adj = np.asarray(adj, np.float64)
    w_mask = np.asarray(w_mask, np.float64); w0 = np.asarray(w0, np.float64)
    rows = []
    for i, nbrs in enumerate(add_all):
        xi = x[i]
        xj = x[np.asarray(nbrs, dtype=np.int64)]
        cen = np.concatenate([np.tile(xi[None, :], (len(nbrs), 1)), xj], axis=1)
        m = 1.0 / (1.0 + np.exp(-(cen @ w_mask)))
        rows.append(xi + np.sum(m * xj, axis=0))
    agg = np.stack(rows)
    return adj @ (agg @ w0)


def reference_forward_with_keep(x_pad, adj_pad, nbr, wm_c, wm_n, w0_pad,
                                keep, drop_rate):
    """Padded-space f64 reference replaying the kernel's dropout keep mask."""
    x = _to_f64(x_pad); adjp = _to_f64(adj_pad); nbrf = _to_f64(nbr)
    wc = _to_f64(wm_c); wn = _to_f64(wm_n); w0f = _to_f64(w0_pad)
    keep = np.asarray(keep, np.float64)
    base = x @ wc
    logits = np.einsum("dnf,fg->dng", nbrf, wn) + base[None, :, :]
    m = 1.0 / (1.0 + np.exp(-logits))
    if drop_rate > 0.0:
        m = m * keep * (1.0 / (1.0 - drop_rate))
    agg = x + np.sum(m * nbrf, axis=0)
    return adjp @ (agg @ w0f)


def _assert_close(got, want, tol, name):
    got = np.asarray(got, dtype=np.float64)
    want = np.asarray(want, dtype=np.float64)
    err = np.max(np.abs(got - want)) / max(float(np.max(np.abs(want))), 1e-6)
    if not np.isfinite(err) or err > tol:
        raise AssertionError(f"{name}: relative error {err:.3e} > {tol:.1e}")


if __name__ == "__main__":
    # Small sizes that deliberately exercise the 128-lane / tile padding path.
    N, F, O, MAX_DEG = 200, 96, 64, 6

    key = jax.random.PRNGKey(0)
    k_x, k_adj, k_w0, k_wm = jax.random.split(key, 4)

    rng = np.random.RandomState(0)
    add_all = [list(map(int, rng.choice(N, size=int(rng.randint(1, MAX_DEG + 1)),
                                        replace=False)))
               for _ in range(N)]

    x = jax.random.normal(k_x, (N, F), jnp.float32)
    adj = jax.random.uniform(k_adj, (N, N), jnp.float32)

    stdv = 1.0 / math.sqrt(O)
    w0 = jax.random.uniform(k_w0, (F, O), jnp.float32, -stdv, stdv)   # weight_0
    # weights_mask0 is never reset in the torch module (uninitialized storage);
    # initialize it deterministically here.
    w_mask = jax.random.uniform(k_wm, (2 * F, F), jnp.float32, -stdv, stdv)

    # ---- production run: training-mode dropout p=0.5 generated in-kernel ----
    out = gcnmask_forward(x, adj, add_all, w_mask, w0, seed=42, drop_rate=0.5)
    out = jax.block_until_ready(out)
    assert out.shape == (N, O)
    assert bool(jnp.all(jnp.isfinite(out)))

    # ---- check 1: dropout disabled vs independent per-node numpy reference --
    out_nodrop = gcnmask_forward(x, adj, add_all, w_mask, w0, drop_rate=0.0)
    ref_nodrop = reference_forward_no_dropout(x, adj, add_all, w_mask, w0)
    _assert_close(out_nodrop, ref_nodrop, 3e-2, "no-dropout path")

    # ---- check 2: dropout path, replaying the in-kernel keep mask -----------
    out_drop, keep = gcnmask_forward(x, adj, add_all, w_mask, w0, seed=42,
                                     drop_rate=0.5, emit_keep=True, tile_n=128)
    x_pad, adj_pad, nbr, wm_c, wm_n, w0_pad = _prepare_inputs(
        x, adj, add_all, w_mask, w0, 128, DEG_CHUNK)
    ref_drop = reference_forward_with_keep(x_pad, adj_pad, nbr, wm_c, wm_n,
                                           w0_pad, keep, 0.5)[:N, :O]
    _assert_close(out_drop, ref_drop, 3e-2, "dropout path")

    print("KERNEL_OK")
</pallas_src>

<mosaic_0001>
module attributes {stable_mosaic.version = 11 : i64} {
  func.func @kernel(%arg0: i32, %arg1: i32, %arg2: memref<1xi32, #tpu.memory_space<smem>>, %arg3: memref<128x128xf32, #tpu.memory_space<vmem>>, %arg4: memref<2x128x128xbf16, #tpu.memory_space<vmem>>, %arg5: memref<128x128xbf16, #tpu.memory_space<vmem>>, %arg6: memref<128x128xbf16, #tpu.memory_space<vmem>>, %arg7: memref<128x128xbf16, #tpu.memory_space<vmem>>, %arg8: memref<128x128xbf16, #tpu.memory_space<vmem>>, %arg9: memref<128x128xf32, #tpu.memory_space<vmem>>, %arg10: memref<128x128xf32, #tpu.memory_space<vmem>>) attributes {dimension_semantics = [#tpu.dimension_semantics<parallel>, #tpu.dimension_semantics<arbitrary>], iteration_bounds = array<i64: 2, 3>, scalar_prefetch = 0 : i64, scratch_operands = 2 : i64, tpu.core_type = #tpu.core_type<tc>, window_params = [{transform_indices = @transform_0, window_bounds = array<i64: 1>}, {transform_indices = @transform_1, window_bounds = array<i64: 128, 128>}, {transform_indices = @transform_2, window_bounds = array<i64: 2, 128, 128>}, {pipeline_mode = #tpu.pipeline_mode<synchronous>, transform_indices = @transform_3, window_bounds = array<i64: 128, 128>}, {pipeline_mode = #tpu.pipeline_mode<synchronous>, transform_indices = @transform_4, window_bounds = array<i64: 128, 128>}, {pipeline_mode = #tpu.pipeline_mode<synchronous>, transform_indices = @transform_5, window_bounds = array<i64: 128, 128>}, {transform_indices = @transform_6, window_bounds = array<i64: 128, 128>}]} {
    %c0_i32 = arith.constant 0 : i32
    %0 = arith.cmpi eq, %arg1, %c0_i32 : i32
    %1 = arith.extui %0 : i1 to i32
    %c0_i32_0 = arith.constant 0 : i32
    %2 = arith.cmpi ne, %1, %c0_i32_0 : i32
    scf.if %2 {
      %c0_21 = arith.constant 0 : index
      %c0_22 = arith.constant 0 : index
      %69 = vector.load %arg3[%c0_21, %c0_22] : memref<128x128xf32, #tpu.memory_space<vmem>>, vector<128x128xf32>
      %70 = arith.truncf %69 : vector<128x128xf32> to vector<128x128xbf16>
      %c0_23 = arith.constant 0 : index
      %c0_24 = arith.constant 0 : index
      %71 = vector.load %arg5[%c0_23, %c0_24] : memref<128x128xbf16, #tpu.memory_space<vmem>>, vector<128x128xbf16>
      %cst_25 = arith.constant dense<0.000000e+00> : vector<128x128xf32>
      %72 = tpu.matmul %70, %71, %cst_25 {dimension_numbers = #tpu.dot_dimension_numbers<[1], [0], [0], [1], [0, 0, 1, 1], [], []>} : vector<128x128xbf16>, vector<128x128xbf16>, vector<128x128xf32> -> vector<128x128xf32>
      %c0_26 = arith.constant 0 : index
      %c0_27 = arith.constant 0 : index
      %73 = vector.load %arg9[%c0_26, %c0_27] : memref<128x128xf32, #tpu.memory_space<vmem>>, vector<128x128xf32>
      tpu.vector_store %arg9[%c0_26, %c0_27], %72 {strides = array<i32>} : memref<128x128xf32, #tpu.memory_space<vmem>>, vector<128x128xf32>,
      %c0_28 = arith.constant 0 : index
      %c0_29 = arith.constant 0 : index
      %74 = vector.load %arg3[%c0_28, %c0_29] : memref<128x128xf32, #tpu.memory_space<vmem>>, vector<128x128xf32>
      %c0_30 = arith.constant 0 : index
      %c0_31 = arith.constant 0 : index
      %75 = vector.load %arg10[%c0_30, %c0_31] : memref<128x128xf32, #tpu.memory_space<vmem>>, vector<128x128xf32>
      tpu.vector_store %arg10[%c0_30, %c0_31], %74 {strides = array<i32>} : memref<128x128xf32, #tpu.memory_space<vmem>>, vector<128x128xf32>,
    } else {
    }
    %c0 = arith.constant 0 : index
    %c0_1 = arith.constant 0 : index
    %c0_2 = arith.constant 0 : index
    %3 = vector.load %arg4[%c0, %c0_1, %c0_2] : memref<2x128x128xbf16, #tpu.memory_space<vmem>>, vector<2x128x128xbf16>
    %4 = vector.shape_cast %3 : vector<2x128x128xbf16> to vector<256x128xbf16>
    %c0_3 = arith.constant 0 : index
    %c0_4 = arith.constant 0 : index
    %5 = vector.load %arg6[%c0_3, %c0_4] : memref<128x128xbf16, #tpu.memory_space<vmem>>, vector<128x128xbf16>
    %cst = arith.constant dense<0.000000e+00> : vector<256x128xf32>
    %6 = tpu.matmul %4, %5, %cst {dimension_numbers = #tpu.dot_dimension_numbers<[1], [0], [0], [1], [0, 0, 1, 1], [], []>} : vector<256x128xbf16>, vector<128x128xbf16>, vector<256x128xf32> -> vector<256x128xf32>
    %7 = vector.shape_cast %6 : vector<256x128xf32> to vector<2x128x128xf32>
    %c0_5 = arith.constant 0 : index
    %c0_6 = arith.constant 0 : index
    %8 = vector.load %arg9[%c0_5, %c0_6] : memref<128x128xf32, #tpu.memory_space<vmem>>, vector<128x128xf32>
    %9 = vector.shape_cast %8 : vector<128x128xf32> to vector<1x128x128xf32>
    %10 = vector.broadcast %9 : vector<1x128x128xf32> to vector<2x128x128xf32>
    %11 = arith.addf %7, %10 : vector<2x128x128xf32>
    %cst_7 = arith.constant 5.000000e-01 : f32
    %12 = vector.broadcast %cst_7 : f32 to vector<2x128x128xf32>
    %13 = arith.mulf %12, %11 : vector<2x128x128xf32>
    %14 = math.tanh %13 : vector<2x128x128xf32>
    %cst_8 = arith.constant 5.000000e-01 : f32
    %15 = vector.broadcast %cst_8 : f32 to vector<2x128x128xf32>
    %16 = arith.mulf %15, %14 : vector<2x128x128xf32>
    %cst_9 = arith.constant 5.000000e-01 : f32
    %17 = vector.broadcast %cst_9 : f32 to vector<2x128x128xf32>
    %18 = arith.addf %16, %17 : vector<2x128x128xf32>
    %19 = tpu.iota {dimensions = array<i32: 0>} : vector<2x128x128xi32>
    %c2_i32 = arith.constant 2 : i32
    %20 = arith.muli %arg1, %c2_i32 : i32
    %21 = vector.broadcast %20 : i32 to vector<2x128x128xi32>
    %22 = arith.addi %19, %21 : vector<2x128x128xi32>
    %23 = tpu.iota {dimensions = array<i32: 1>} : vector<2x128x128xi32>
    %c128_i32 = arith.constant 128 : i32
    %24 = arith.muli %arg0, %c128_i32 : i32
    %25 = vector.broadcast %24 : i32 to vector<2x128x128xi32>
    %26 = arith.addi %23, %25 : vector<2x128x128xi32>
    %27 = tpu.iota {dimensions = array<i32: 2>} : vector<2x128x128xi32>
    %c-1640531535_i32 = arith.constant -1640531535 : i32
    %28 = vector.broadcast %c-1640531535_i32 : i32 to vector<2x128x128xi32>
    %29 = arith.muli %22, %28 : vector<2x128x128xi32>
    %c-2048144777_i32 = arith.constant -2048144777 : i32
    %30 = vector.broadcast %c-2048144777_i32 : i32 to vector<2x128x128xi32>
    %31 = arith.muli %26, %30 : vector<2x128x128xi32>
    %32 = arith.xori %29, %31 : vector<2x128x128xi32>
    %c-1028477379_i32 = arith.constant -1028477379 : i32
    %33 = vector.broadcast %c-1028477379_i32 : i32 to vector<2x128x128xi32>
    %34 = arith.muli %27, %33 : vector<2x128x128xi32>
    %35 = arith.xori %32, %34 : vector<2x128x128xi32>
    %c0_10 = arith.constant 0 : index
    %36 = memref.load %arg2[%c0_10] : memref<1xi32, #tpu.memory_space<smem>>
    %37 = vector.broadcast %36 : i32 to vector<2x128x128xi32>
    %38 = arith.xori %35, %37 : vector<2x128x128xi32>
    %c16_i32 = arith.constant 16 : i32
    %39 = vector.broadcast %c16_i32 : i32 to vector<2x128x128xi32>
    %40 = arith.shrui %38, %39 : vector<2x128x128xi32>
    %41 = arith.xori %38, %40 : vector<2x128x128xi32>
    %c2146121005_i32 = arith.constant 2146121005 : i32
    %42 = vector.broadcast %c2146121005_i32 : i32 to vector<2x128x128xi32>
    %43 = arith.muli %41, %42 : vector<2x128x128xi32>
    %c15_i32 = arith.constant 15 : i32
    %44 = vector.broadcast %c15_i32 : i32 to vector<2x128x128xi32>
    %45 = arith.shrui %43, %44 : vector<2x128x128xi32>
    %46 = arith.xori %43, %45 : vector<2x128x128xi32>
    %c-2073254261_i32 = arith.constant -2073254261 : i32
    %47 = vector.broadcast %c-2073254261_i32 : i32 to vector<2x128x128xi32>
    %48 = arith.muli %46, %47 : vector<2x128x128xi32>
    %c16_i32_11 = arith.constant 16 : i32
    %49 = vector.broadcast %c16_i32_11 : i32 to vector<2x128x128xi32>
    %50 = arith.shrui %48, %49 : vector<2x128x128xi32>
    %51 = arith.xori %48, %50 : vector<2x128x128xi32>
    %c1_i32 = arith.constant 1 : i32
    %52 = vector.broadcast %c1_i32 : i32 to vector<2x128x128xi32>
    %53 = arith.shrui %51, %52 : vector<2x128x128xi32>
    %c1073741824_i32 = arith.constant 1073741824 : i32
    %54 = vector.broadcast %c1073741824_i32 : i32 to vector<2x128x128xi32>
    %55 = arith.cmpi ult, %53, %54 : vector<2x128x128xi32>
    %cst_12 = arith.constant 2.000000e+00 : f32
    %56 = vector.broadcast %cst_12 : f32 to vector<2x128x128xf32>
    %57 = arith.mulf %18, %56 : vector<2x128x128xf32>
    %cst_13 = arith.constant 0.000000e+00 : f32
    %58 = vector.broadcast %cst_13 : f32 to vector<2x128x128xf32>
    %59 = arith.select %55, %57, %58 : vector<2x128x128xi1>, vector<2x128x128xf32>
    %c0_14 = arith.constant 0 : index
    %c0_15 = arith.constant 0 : index
    %60 = vector.load %arg10[%c0_14, %c0_15] : memref<128x128xf32, #tpu.memory_space<vmem>>, vector<128x128xf32>
    %61 = arith.extf %3 : vector<2x128x128xbf16> to vector<2x128x128xf32>
    %62 = arith.mulf %59, %61 : vector<2x128x128xf32>
    %cst_16 = arith.constant dense<0.000000e+00> : vector<128x128xf32>
    %63 = vector.multi_reduction <add>, %62, %cst_16 [0] : vector<2x128x128xf32> to vector<128x128xf32>
    %64 = arith.addf %60, %63 : vector<128x128xf32>
    %c0_17 = arith.constant 0 : index
    %c0_18 = arith.constant 0 : index
    %65 = vector.load %arg10[%c0_17, %c0_18] : memref<128x128xf32, #tpu.memory_space<vmem>>, vector<128x128xf32>
    tpu.vector_store %arg10[%c0_17, %c0_18], %64 {strides = array<i32>} : memref<128x128xf32, #tpu.memory_space<vmem>>, vector<128x128xf32>,
    %c2_i32_19 = arith.constant 2 : i32
    %66 = arith.cmpi eq, %arg1, %c2_i32_19 : i32
    %67 = arith.extui %66 : i1 to i32
    %c0_i32_20 = arith.constant 0 : i32
    %68 = arith.cmpi ne, %67, %c0_i32_20 : i32
    scf.if %68 {
      %c0_21 = arith.constant 0 : index
      %c0_22 = arith.constant 0 : index
      %69 = vector.load %arg10[%c0_21, %c0_22] : memref<128x128xf32, #tpu.memory_space<vmem>>, vector<128x128xf32>
      %70 = arith.truncf %69 : vector<128x128xf32> to vector<128x128xbf16>
      %c0_23 = arith.constant 0 : index
      %c0_24 = arith.constant 0 : index
      %71 = vector.load %arg7[%c0_23, %c0_24] : memref<128x128xbf16, #tpu.memory_space<vmem>>, vector<128x128xbf16>
      %cst_25 = arith.constant dense<0.000000e+00> : vector<128x128xf32>
      %72 = tpu.matmul %70, %71, %cst_25 {dimension_numbers = #tpu.dot_dimension_numbers<[1], [0], [0], [1], [0, 0, 1, 1], [], []>} : vector<128x128xbf16>, vector<128x128xbf16>, vector<128x128xf32> -> vector<128x128xf32>
      %73 = arith.truncf %72 : vector<128x128xf32> to vector<128x128xbf16>
      %c0_26 = arith.constant 0 : index
      %c0_27 = arith.constant 0 : index
      %74 = vector.load %arg8[%c0_26, %c0_27] : memref<128x128xbf16, #tpu.memory_space<vmem>>, vector<128x128xbf16>
      tpu.vector_store %arg8[%c0_26, %c0_27], %73 {strides = array<i32>} : memref<128x128xbf16, #tpu.memory_space<vmem>>, vector<128x128xbf16>,
    } else {
    }
    return
  }
  func.func @transform_0(%arg0: i32, %arg1: i32) -> i32 {
    %c0_i32 = arith.constant 0 : i32
    %c0_i32_0 = arith.constant 0 : i32
    return %c0_i32 : i32
  }
  func.func @transform_1(%arg0: i32, %arg1: i32) -> (i32, i32) {
    %c0_i32 = arith.constant 0 : i32
    %c0_i32_0 = arith.constant 0 : i32
    return %arg0, %c0_i32 : i32, i32
  }
  func.func @transform_2(%arg0: i32, %arg1: i32) -> (i32, i32, i32) {
    %c0_i32 = arith.constant 0 : i32
    %c0_i32_0 = arith.constant 0 : i32
    return %arg1, %arg0, %c0_i32 : i32, i32, i32
  }
  func.func @transform_3(%arg0: i32, %arg1: i32) -> (i32, i32) {
    %c0_i32 = arith.constant 0 : i32
    %c0_i32_0 = arith.constant 0 : i32
    %c0_i32_1 = arith.constant 0 : i32
    return %c0_i32, %c0_i32_0 : i32, i32
  }
  func.func @transform_4(%arg0: i32, %arg1: i32) -> (i32, i32) {
    %c0_i32 = arith.constant 0 : i32
    %c0_i32_0 = arith.constant 0 : i32
    %c0_i32_1 = arith.constant 0 : i32
    return %c0_i32, %c0_i32_0 : i32, i32
  }
  func.func @transform_5(%arg0: i32, %arg1: i32) -> (i32, i32) {
    %c0_i32 = arith.constant 0 : i32
    %c0_i32_0 = arith.constant 0 : i32
    %c0_i32_1 = arith.constant 0 : i32
    return %c0_i32, %c0_i32_0 : i32, i32
  }
  func.func @transform_6(%arg0: i32, %arg1: i32) -> (i32, i32) {
    %c0_i32 = arith.constant 0 : i32
    %c0_i32_0 = arith.constant 0 : i32
    return %arg0, %c0_i32 : i32, i32
  }
}

</mosaic_0001>

<llo_original>
// kernel: tpu_custom_call.1
$region0: #{tpu_custom_call.1}
  #allocation0 [shape = 'u32[]', space=smem, size = 0x4, offset = 0x4, fixed_abs, tag = 'smem constant byte address 0x4 - core index']
  #allocation1 [shape = 'u32[72,128]{1,0:T(1,128)}', space=vmem, size = 0x9000, scoped, tag = 'internal scratch']
  #allocation2 [shape = 'f32[128,128]{1,0:T(8,128)}', space=vmem, size = 0x10000, scoped, tag = 'scratch operand']
  #allocation3 [shape = 'f32[128,128]{1,0:T(8,128)}', space=vmem, size = 0x10000, scoped, tag = 'scratch operand']
  #allocation4 [shape = 's32[1]{0:T(128)S(6)}', space=smem, size = 0x200, scoped, tag = 'scoped memory for tpu_custom_call.1']
  #allocation15 [shape = 's32[]', space=sflag, size = 0x4, offset = 0, fixed_abs, tag = 'sflag constant byte address 0x0 - dummy sync flag']
  %s0 = inlined_call_operand.<no memory space> [shape: s32[1], index: 0, kind: input, shape index: {}]
  %s1 = inlined_call_operand.hbm [shape: f32[256,128], index: 1, kind: input, shape index: {}]
  %s2 = inlined_call_operand.hbm [shape: bf16[6,256,128], index: 2, kind: input, shape index: {}]
  %s3 = inlined_call_operand.hbm [shape: bf16[128,128], index: 3, kind: input, shape index: {}]
  %s4 = inlined_call_operand.hbm [shape: bf16[128,128], index: 4, kind: input, shape index: {}]
  %s5 = inlined_call_operand.hbm [shape: bf16[128,128], index: 5, kind: input, shape index: {}]
  %s6 = inlined_call_operand.hbm [shape: bf16[256,128], index: 6, kind: output, shape index: {}]
  %s7 = sld [smem:[#allocation0]]
  $region85: #{tpu_custom_call.1} parent=0
    _
  %s9 = ssub.s32 1, %s7
  %s10 = scalar_select 0, %s9, %s7
  %11 = sst [smem:[#allocation4]] %s0
  $region1: #{tpu_custom_call.1} parent=0
    #allocation5 [shape = 'u8[131072]{0}', space=vmem, size = 0x20000, scoped, tag = 'input window, operand 1']
    #allocation6 [shape = 's32[2]{0}', space=sflag, size = 0x8, scoped, tag = 'scoped memory for tpu_custom_call.1']
    #allocation7 [shape = 's32[2]{0}', space=sflag, size = 0x8, scoped, tag = 'scoped memory for tpu_custom_call.1']
    #allocation8 [shape = 'u8[131072]{0}', space=vmem, size = 0x20000, scoped, tag = 'input window, operand 2']
    #allocation9 [shape = 's32[2]{0}', space=sflag, size = 0x8, scoped, tag = 'scoped memory for tpu_custom_call.1']
    #allocation10 [shape = 'u8[32768]{0}', space=vmem, size = 0x8000, scoped, tag = 'input window, operand 3, single buffered']
    #allocation11 [shape = 'u8[32768]{0}', space=vmem, size = 0x8000, scoped, tag = 'input window, operand 4, single buffered']
    #allocation12 [shape = 's32[1]{0}', space=sflag, size = 0x4, scoped, tag = 'scoped memory for tpu_custom_call.1']
    #allocation13 [shape = 'u8[32768]{0}', space=vmem, size = 0x8000, scoped, tag = 'input window, operand 5, single buffered']
    #allocation14 [shape = 'u8[65536]{0}', space=vmem, size = 0x10000, scoped, tag = 'output window, operand 0']
    %12 = vsyncpa [#allocation6], 0
    %s13 = scalar_lea.sflag [#allocation6], 1
    %14 = vsyncpa %s13, 0
    %15 = vsyncpa [#allocation9], 0
    %s16 = scalar_lea.sflag [#allocation9], 1
    %17 = vsyncpa %s16, 0
    %18 = vsyncpa [#allocation12], 0
    %19 = vsyncpa [#allocation7], 0
    %s20 = scalar_lea.sflag [#allocation7], 1
    %21 = vsyncpa %s20, 0
    loop: start=0, step=1, limit=8
    $region2: #{tpu_custom_call.1} parent=1 // loop_pre_header
      _
    $region3: #{tpu_custom_call.1} parent=1 // loop_header
      %s23 = sphi 0, %s27
      %p24 = scmp.ge.s32.totalorder %s23, 8
      %s30 = sphi 0, %s42
      %s31 = sphi 0, %s38
      %s32 = sphi 0, %s30
      %s33 = sphi 0, %s31
      %s34 = sphi 0, %s32
      %s35 = sphi 0, %s33
      %s43 = sphi 0, %s43
      %s45 = sphi 0, %s43
      %s46 = sphi 0, %s45
      %s60 = sphi 0, %s46
      %s66 = sphi 0, %s68
      %s69 = sphi 0, %s66
      %s70 = sphi 0, %s69
      %s86 = sphi 0, %s70
      %s94 = sphi 0, %s96
      %s97 = sphi 0, %s94
      %s98 = sphi 0, %s97
      %s114 = sphi 0, %s98
      %s118 = sphi 0, %s118
      %s120 = sphi 0, %s118
      %s121 = sphi 0, %s120
      %s135 = sphi 0, %s121
      %s139 = sphi 0, %s139
      %s141 = sphi 0, %s139
      %s142 = sphi 0, %s141
      %s156 = sphi 0, %s142
      %s160 = sphi 0, %s160
      %s162 = sphi 0, %s160
      %s163 = sphi 0, %s162
      %s177 = sphi 0, %s163
      %s183 = sphi 0, %s185
      %s186 = sphi 0, %s183
      %s187 = sphi 0, %s186
      %s203 = sphi 0, %s187
    $region4: #{tpu_custom_call.1} parent=1 // loop_header_branch
      %26 = sbr.rel (%p24) target = $region8
    $region5: #{tpu_custom_call.1} parent=1 // loop_body
      %s28 = ssub.s32 %s23, 1
      %s29 = ssub.s32 %s23, 2
      %s36 = sadd.s32 1, %s31
      %p37 = scmp.ge.s32.totalorder %s36, 3
      %s38 = scalar_select %p37, 0, %s36
      %s39 = sadd.s32 1, %s30
      %s40 = scalar_select %p37, %s39, %s30
      %p41 = scmp.ge.s32.totalorder %s40, 2
      %s42 = scalar_select %p41, 0, %s40
      %s44 = sadd.s32 %s43, 1
      %p47 = scmp.eq.s32.totalorder %s23, 5
      %p48 = scmp.ne.s32.totalorder %s43, %s45
      %p49 = scmp.eq.s32.totalorder %s23, 0
      %p50 = por %p48, %p49
      %p51 = scmp.ne.s32.totalorder %s43, %s45
      %p52 = scmp.eq.s32.totalorder %s28, 5
      %p53 = por %p51, %p52
      %p54 = scmp.ne.s32.totalorder %s45, %s46
      %p55 = scmp.eq.s32.totalorder %s28, 0
      %p56 = por %p54, %p55
      %p57 = scmp.ne.s32.totalorder %s45, %s46
      %p58 = scmp.eq.s32.totalorder %s29, 5
      %p59 = por %p57, %p58
      %p61 = scmp.ne.s32.totalorder %s46, %s60
      %p62 = scmp.eq.s32.totalorder %s29, 0
      %p63 = por %p61, %p62
      %s64 = ssub.s32 %s30, %s42
      %p65 = scmp.eq.s32.totalorder %s64, 0
      %s67 = sadd.s32 %s66, 1
      %s68 = scalar_select %p65, %s66, %s67
      %p71 = pneg %p65
      %p72 = scmp.eq.s32.totalorder %s23, 5
      %p73 = por %p71, %p72
      %p74 = scmp.ne.s32.totalorder %s66, %s69
      %p75 = scmp.eq.s32.totalorder %s23, 0
      %p76 = por %p74, %p75
      %p77 = scmp.ne.s32.totalorder %s66, %s69
      %p78 = scmp.eq.s32.totalorder %s28, 5
      %p79 = por %p77, %p78
      %p80 = scmp.ne.s32.totalorder %s69, %s70
      %p81 = scmp.eq.s32.totalorder %s28, 0
      %p82 = por %p80, %p81
      %p83 = scmp.ne.s32.totalorder %s69, %s70
      %p84 = scmp.eq.s32.totalorder %s29, 5
      %p85 = por %p83, %p84
      %p87 = scmp.ne.s32.totalorder %s70, %s86
      %p88 = scmp.eq.s32.totalorder %s29, 0
      %p89 = por %p87, %p88
      %s90 = ssub.s32 %s31, %s38
      %s91 = ssub.s32 %s30, %s42
      %s92 = sor.u32 %s90, %s91
      %p93 = scmp.eq.s32.totalorder %s92, 0
      %s95 = sadd.s32 %s94, 1
      %s96 = scalar_select %p93, %s94, %s95
      %p99 = pneg %p93
      %p100 = scmp.eq.s32.totalorder %s23, 5
      %p101 = por %p99, %p100
      %p102 = scmp.ne.s32.totalorder %s94, %s97
      %p103 = scmp.eq.s32.totalorder %s23, 0
      %p104 = por %p102, %p103
      %p105 = scmp.ne.s32.totalorder %s94, %s97
      %p106 = scmp.eq.s32.totalorder %s28, 5
      %p107 = por %p105, %p106
      %p108 = scmp.ne.s32.totalorder %s97, %s98
      %p109 = scmp.eq.s32.totalorder %s28, 0
      %p110 = por %p108, %p109
      %p111 = scmp.ne.s32.totalorder %s97, %s98
      %p112 = scmp.eq.s32.totalorder %s29, 5
      %p113 = por %p111, %p112
      %p115 = scmp.ne.s32.totalorder %s98, %s114
      %p116 = scmp.eq.s32.totalorder %s29, 0
      %p117 = por %p115, %p116
      %s119 = sadd.s32 %s118, 1
      %p122 = scmp.eq.s32.totalorder %s23, 5
      %p123 = scmp.ne.s32.totalorder %s118, %s120
      %p124 = scmp.eq.s32.totalorder %s23, 0
      %p125 = por %p123, %p124
      %p126 = scmp.ne.s32.totalorder %s118, %s120
      %p127 = scmp.eq.s32.totalorder %s28, 5
      %p128 = por %p126, %p127
      %p129 = scmp.ne.s32.totalorder %s120, %s121
      %p130 = scmp.eq.s32.totalorder %s28, 0
      %p131 = por %p129, %p130
      %p132 = scmp.ne.s32.totalorder %s120, %s121
      %p133 = scmp.eq.s32.totalorder %s29, 5
      %p134 = por %p132, %p133
      %p136 = scmp.ne.s32.totalorder %s121, %s135
      %p137 = scmp.eq.s32.totalorder %s29, 0
      %p138 = por %p136, %p137
      %s140 = sadd.s32 %s139, 1
      %p143 = scmp.eq.s32.totalorder %s23, 5
      %p144 = scmp.ne.s32.totalorder %s139, %s141
      %p145 = scmp.eq.s32.totalorder %s23, 0
      %p146 = por %p144, %p145
      %p147 = scmp.ne.s32.totalorder %s139, %s141
      %p148 = scmp.eq.s32.totalorder %s28, 5
      %p149 = por %p147, %p148
      %p150 = scmp.ne.s32.totalorder %s141, %s142
      %p151 = scmp.eq.s32.totalorder %s28, 0
      %p152 = por %p150, %p151
      %p153 = scmp.ne.s32.totalorder %s141, %s142
      %p154 = scmp.eq.s32.totalorder %s29, 5
      %p155 = por %p153, %p154
      %p157 = scmp.ne.s32.totalorder %s142, %s156
      %p158 = scmp.eq.s32.totalorder %s29, 0
      %p159 = por %p157, %p158
      %s161 = sadd.s32 %s160, 1
      %p164 = scmp.eq.s32.totalorder %s23, 5
      %p165 = scmp.ne.s32.totalorder %s160, %s162
      %p166 = scmp.eq.s32.totalorder %s23, 0
      %p167 = por %p165, %p166
      %p168 = scmp.ne.s32.totalorder %s160, %s162
      %p169 = scmp.eq.s32.totalorder %s28, 5
      %p170 = por %p168, %p169
      %p171 = scmp.ne.s32.totalorder %s162, %s163
      %p172 = scmp.eq.s32.totalorder %s28, 0
      %p173 = por %p171, %p172
      %p174 = scmp.ne.s32.totalorder %s162, %s163
      %p175 = scmp.eq.s32.totalorder %s29, 5
      %p176 = por %p174, %p175
      %p178 = scmp.ne.s32.totalorder %s163, %s177
      %p179 = scmp.eq.s32.totalorder %s29, 0
      %p180 = por %p178, %p179
      %s181 = ssub.s32 %s30, %s42
      %p182 = scmp.eq.s32.totalorder %s181, 0
      %s184 = sadd.s32 %s183, 1
      %s185 = scalar_select %p182, %s183, %s184
      %p188 = pneg %p182
      %p189 = scmp.eq.s32.totalorder %s23, 5
      %p190 = por %p188, %p189
      %p191 = scmp.ne.s32.totalorder %s183, %s186
      %p192 = scmp.eq.s32.totalorder %s23, 0
      %p193 = por %p191, %p192
      %p194 = scmp.ne.s32.totalorder %s183, %s186
      %p195 = scmp.eq.s32.totalorder %s28, 5
      %p196 = por %p194, %p195
      %p197 = scmp.ne.s32.totalorder %s186, %s187
      %p198 = scmp.eq.s32.totalorder %s28, 0
      %p199 = por %p197, %p198
      %p200 = scmp.ne.s32.totalorder %s186, %s187
      %p201 = scmp.eq.s32.totalorder %s29, 5
      %p202 = por %p200, %p201
      %p204 = scmp.ne.s32.totalorder %s187, %s203
      %p205 = scmp.eq.s32.totalorder %s29, 0
      %p206 = por %p204, %p205
      %p207 = scmp.le.s32.totalorder 1, %s23
      %p208 = scmp.lt.s32.totalorder %s23, 7
      %p209 = pnand %p207, %p208
      %p210 = pneg %p209
      // Predicated region
      $region9: #{tpu_custom_call.1} parent=5 // pred_check
        _
      $region10: #{tpu_custom_call.1} parent=5 // pred_check_branch
        %212 = sbr.rel (%p209) target = $region12
      $region11: #{tpu_custom_call.1} parent=5 // pred_region
        %s213 = ssub.s32 %s23, 1
        // Predicated region
        $region13: #{tpu_custom_call.1} parent=11 // pred_check
          %p214 = pneg %p56
        $region14: #{tpu_custom_call.1} parent=11 // pred_check_branch
          %216 = sbr.rel (%p214) target = $region16
        $region15: #{tpu_custom_call.1} parent=11 // pred_region
          _
        $region16: #{tpu_custom_call.1} parent=11 // pred_fallthru
          _
        // Predicated region
        $region17: #{tpu_custom_call.1} parent=11 // pred_check
          %p217 = pneg %p131
        $region18: #{tpu_custom_call.1} parent=11 // pred_check_branch
          %219 = sbr.rel (%p217) target = $region20
        $region19: #{tpu_custom_call.1} parent=11 // pred_region
          %221 = vsyncadd [#allocation9], 0
          %s222 = sshll.u32 %s3, 4
          %s223 = int_to_ptr.hbm [resolvable:$true] %s222
          %s224 = sshll.u32 [#allocation10], 4
          %s225 = int_to_ptr.vmem [resolvable:$true] %s224
          %230 = dma.hbm_to_vmem [thread:$0]  %s223, 1024, %s225, [#allocation9], 64, 64, 4
        $region20: #{tpu_custom_call.1} parent=11 // pred_fallthru
          _
        // Predicated region
        $region21: #{tpu_custom_call.1} parent=11 // pred_check
          %p231 = pneg %p152
        $region22: #{tpu_custom_call.1} parent=11 // pred_check_branch
          %233 = sbr.rel (%p231) target = $region24
        $region23: #{tpu_custom_call.1} parent=11 // pred_region
          %235 = vsyncadd [#allocation12], 0
          %s236 = sshll.u32 %s4, 4
          %s237 = int_to_ptr.hbm [resolvable:$true] %s236
          %s238 = sshll.u32 [#allocation11], 4
          %s239 = int_to_ptr.vmem [resolvable:$true] %s238
          %244 = dma.hbm_to_vmem [thread:$0]  %s237, 1024, %s239, [#allocation12], 64, 64, 4
        $region24: #{tpu_custom_call.1} parent=11 // pred_fallthru
          _
        // Predicated region
        $region25: #{tpu_custom_call.1} parent=11 // pred_check
          %p245 = pneg %p173
        $region26: #{tpu_custom_call.1} parent=11 // pred_check_branch
          %247 = sbr.rel (%p245) target = $region28
        $region27: #{tpu_custom_call.1} parent=11 // pred_region
          %249 = vsyncadd [#allocation12], 0
          %s250 = sshll.u32 %s5, 4
          %s251 = int_to_ptr.hbm [resolvable:$true] %s250
          %s252 = sshll.u32 [#allocation13], 4
          %s253 = int_to_ptr.vmem [resolvable:$true] %s252
          %258 = dma.hbm_to_vmem [thread:$0]  %s251, 1024, %s253, [#allocation12], 64, 64, 4
        $region28: #{tpu_custom_call.1} parent=11 // pred_fallthru
          _
      $region12: #{tpu_custom_call.1} parent=5 // pred_fallthru
        _
      %p259 = scmp.lt.s32.totalorder %s23, 6
      // Predicated region
      $region29: #{tpu_custom_call.1} parent=5 // pred_check
        %p260 = pneg %p259
      $region30: #{tpu_custom_call.1} parent=5 // pred_check_branch
        %262 = sbr.rel (%p260) target = $region32
      $region31: #{tpu_custom_call.1} parent=5 // pred_region
        // Predicated region
        $region33: #{tpu_custom_call.1} parent=31 // pred_check
          %p263 = pneg %p76
        $region34: #{tpu_custom_call.1} parent=31 // pred_check_branch
          %265 = sbr.rel (%p263) target = $region36
        $region35: #{tpu_custom_call.1} parent=31 // pred_region
          %s266 = sand.u32 %s66, 1
          %s267 = scalar_lea.sflag [#allocation6], %s266
          %s268 = sand.u32 %s66, 1
          %s269 = smul.addr %s268, 128
          %s270 = scalar_lea.vmem [#allocation5], %s269
          %s271 = smul.u32 16, %s30
          %273 = vsyncadd %s267, 0
          %s274 = smul.addr %s271, 8
          %s275 = scalar_lea.hbm %s1, %s274
          %s276 = sshll.u32 %s275, 4
          %s277 = int_to_ptr.hbm [resolvable:$true] %s276
          %s278 = sshll.u32 %s270, 4
          %s279 = int_to_ptr.vmem [resolvable:$true] %s278
          %284 = dma.hbm_to_vmem [thread:$0]  %s277, 2048, %s279, %s267, 128, 128, 8
        $region36: #{tpu_custom_call.1} parent=31 // pred_fallthru
          _
        // Predicated region
        $region37: #{tpu_custom_call.1} parent=31 // pred_check
          %p285 = pneg %p104
        $region38: #{tpu_custom_call.1} parent=31 // pred_check_branch
          %287 = sbr.rel (%p285) target = $region40
        $region39: #{tpu_custom_call.1} parent=31 // pred_region
          #allocation16 [shape = 'u32[6]{0}', space=smem, size = 0x18, scoped, tag = 'DMA stride descriptor']
          %s288 = sand.u32 %s23, 1
          %s289 = scalar_lea.sflag [#allocation9], %s288
          %s290 = sand.u32 %s94, 1
          %s291 = smul.addr %s290, 128
          %s292 = scalar_lea.vmem [#allocation8], %s291
          %s293 = smul.u32 2, %s31
          %s294 = smul.u32 16, %s30
          %296 = vsyncadd %s289, 0
          %s297 = smul.addr %s293, 32
          %s298 = sadd.s32 %s294, %s297
          %s299 = smul.addr %s298, 4
          %s300 = scalar_lea.hbm %s2, %s299
          %s302 = sshll.u32 1, 14
          %s303 = sxor.u32 4294967295, %s302
          %s305 = sld [smem:[#allocation0]]
          %s306 = sadd.s32 2, %s305
          %s308 = sshll.u32 7, 26
          %s309 = sxor.u32 4294967295, %s308
          %s310 = sand.u32 0, %s309
          %s311 = sshll.u32 %s306, 26
          %s312 = sor.u32 %s310, %s311
          %s313 = sshll.u32 %s300, 4
          %s314 = int_to_ptr.hbm [resolvable:$true] %s313
          %s315 = sshll.u32 %s292, 4
          %s316 = int_to_ptr.vmem [resolvable:$true] %s315
          %322 = sst [smem:[#allocation16]] 2048
          %s323 = scalar_lea.smem [#allocation16], 1
          %324 = sst [smem:[%s323]] 1024
          %s325 = scalar_lea.smem [#allocation16], 2
          %326 = sst [smem:[%s325]] 16
          %s327 = scalar_lea.smem [#allocation16], 3
          %328 = sst [smem:[%s327]] 64
          %s329 = scalar_lea.smem [#allocation16], 4
          %330 = sst [smem:[%s329]] 64
          %s331 = scalar_lea.smem [#allocation16], 5
          %332 = sst [smem:[%s331]] 4
          %334 = dma.general %s314, 2048, %s316, %s289, [#allocation15], [#allocation16], %s312, 0
        $region40: #{tpu_custom_call.1} parent=31 // pred_fallthru
          _
      $region32: #{tpu_custom_call.1} parent=5 // pred_fallthru
        _
      %p335 = scmp.le.s32.totalorder 1, %s23
      %p336 = scmp.lt.s32.totalorder %s23, 7
      %p337 = pnand %p335, %p336
      %p338 = pneg %p337
      // Predicated region
      $region41: #{tpu_custom_call.1} parent=5 // pred_check
        _
      $region42: #{tpu_custom_call.1} parent=5 // pred_check_branch
        %340 = sbr.rel (%p337) target = $region44
      $region43: #{tpu_custom_call.1} parent=5 // pred_region
        %s341 = ssub.s32 %s23, 1
        %s342 = sand.u32 %s69, 1
        %s343 = scalar_lea.sflag [#allocation6], %s342
        %s344 = sand.u32 %s69, 1
        %s345 = smul.addr %s344, 128
        %s346 = scalar_lea.vmem [#allocation5], %s345
        // Predicated region
        $region45: #{tpu_custom_call.1} parent=43 // pred_check
          %p347 = pneg %p82
        $region46: #{tpu_custom_call.1} parent=43 // pred_check_branch
          %349 = sbr.rel (%p347) target = $region48
        $region47: #{tpu_custom_call.1} parent=43 // pred_region
          %351 = dma.done %s343, 2048
        $region48: #{tpu_custom_call.1} parent=43 // pred_fallthru
          _
        %s352 = sand.u32 %s28, 1
        %s353 = scalar_lea.sflag [#allocation9], %s352
        %s354 = sand.u32 %s97, 1
        %s355 = smul.addr %s354, 128
        %s356 = scalar_lea.vmem [#allocation8], %s355
        // Predicated region
        $region49: #{tpu_custom_call.1} parent=43 // pred_check
          %p357 = pneg %p110
        $region50: #{tpu_custom_call.1} parent=43 // pred_check_branch
          %359 = sbr.rel (%p357) target = $region52
        $region51: #{tpu_custom_call.1} parent=43 // pred_region
          %361 = dma.done %s353, 2048
        $region52: #{tpu_custom_call.1} parent=43 // pred_fallthru
          _
        // Predicated region
        $region53: #{tpu_custom_call.1} parent=43 // pred_check
          %p362 = pneg %p131
        $region54: #{tpu_custom_call.1} parent=43 // pred_check_branch
          %364 = sbr.rel (%p362) target = $region56
        $region55: #{tpu_custom_call.1} parent=43 // pred_region
          %366 = dma.done [#allocation9], 1024
        $region56: #{tpu_custom_call.1} parent=43 // pred_fallthru
          _
        // Predicated region
        $region57: #{tpu_custom_call.1} parent=43 // pred_check
          %p367 = pneg %p152
        $region58: #{tpu_custom_call.1} parent=43 // pred_check_branch
          %369 = sbr.rel (%p367) target = $region60
        $region59: #{tpu_custom_call.1} parent=43 // pred_region
          %371 = dma.done [#allocation12], 1024
        $region60: #{tpu_custom_call.1} parent=43 // pred_fallthru
          _
        // Predicated region
        $region61: #{tpu_custom_call.1} parent=43 // pred_check
          %p372 = pneg %p173
        $region62: #{tpu_custom_call.1} parent=43 // pred_check_branch
          %374 = sbr.rel (%p372) target = $region64
        $region63: #{tpu_custom_call.1} parent=43 // pred_region
          %376 = dma.done [#allocation12], 1024
        $region64: #{tpu_custom_call.1} parent=43 // pred_fallthru
          _
        %p377 = pneg %p56
        %p378 = pneg %p53
        %s379 = sand.u32 %s69, 1
        %s380 = scalar_lea.sflag [#allocation6], %s379
        %s381 = sand.u32 %s69, 1
        %s382 = smul.addr %s381, 128
        %s383 = scalar_lea.vmem [#allocation5], %s382
        %p384 = pneg %p82
        %p385 = pneg %p79
        %s386 = sand.u32 %s28, 1
        %s387 = scalar_lea.sflag [#allocation9], %s386
        %s388 = sand.u32 %s97, 1
        %s389 = smul.addr %s388, 128
        %s390 = scalar_lea.vmem [#allocation8], %s389
        %p391 = pneg %p110
        %p392 = pneg %p107
        %p393 = pneg %p131
        %p394 = pneg %p128
        %p395 = pneg %p152
        %p396 = pneg %p149
        %p397 = pneg %p173
        %p398 = pneg %p170
        %p399 = pneg %p199
        %p400 = pneg %p196
        %s401 = sand.u32 %s186, 1
        %s402 = scalar_lea.sflag [#allocation7], %s401
        %s403 = sand.u32 %s186, 1
        %s404 = smul.addr %s403, 64
        %s405 = scalar_lea.vmem [#allocation14], %s404
        %s406 = smul.u32 16, %s32
        %s407 = smul.u32 2, %s33
        %s408 = smul.u32 16, %s32
        %s409 = smul.u32 16, %s32
        %p410 = scmp.eq.s32.totalorder %s33, 0
        // Predicated region
        $region65: #{tpu_custom_call.1} parent=43 // pred_check
          %p411 = pneg %p410
        $region66: #{tpu_custom_call.1} parent=43 // pred_check_branch
          %413 = sbr.rel (%p411) target = $region68
        $region67: #{tpu_custom_call.1} parent=43 // pred_region
          %v414 = vld [vmem:[%s346] sm:$0xff]
          %v415 = vld [vmem:[%s346 + $0x8] sm:$0xff]
          %v416 = vld [vmem:[%s346 + $0x10] sm:$0xff]
          %v417 = vld [vmem:[%s346 + $0x18] sm:$0xff]
          %v418 = vld [vmem:[%s346 + $0x20] sm:$0xff]
          %v419 = vld [vmem:[%s346 + $0x28] sm:$0xff]
          %v420 = vld [vmem:[%s346 + $0x30] sm:$0xff]
          %v421 = vld [vmem:[%s346 + $0x38] sm:$0xff]
          %v422 = vld [vmem:[%s346 + $0x40] sm:$0xff]
          %v423 = vld [vmem:[%s346 + $0x48] sm:$0xff]
          %v424 = vld [vmem:[%s346 + $0x50] sm:$0xff]
          %v425 = vld [vmem:[%s346 + $0x58] sm:$0xff]
          %v426 = vld [vmem:[%s346 + $0x60] sm:$0xff]
          %v427 = vld [vmem:[%s346 + $0x68] sm:$0xff]
          %v428 = vld [vmem:[%s346 + $0x70] sm:$0xff]
          %v429 = vld [vmem:[%s346 + $0x78] sm:$0xff]
          %v430 = vpack.c.bf16 %v415, %v414
          %v431 = vpack.c.bf16 %v417, %v416
          %v432 = vpack.c.bf16 %v419, %v418
          %v433 = vpack.c.bf16 %v421, %v420
          %v434 = vpack.c.bf16 %v423, %v422
          %v435 = vpack.c.bf16 %v425, %v424
          %v436 = vpack.c.bf16 %v427, %v426
          %v437 = vpack.c.bf16 %v429, %v428
          %v438 = vld [vmem:[#allocation10] sm:$0xf]
          %v439 = vld [vmem:[#allocation10 + $0x4] sm:$0xf]
          %v440 = vld [vmem:[#allocation10 + $0x8] sm:$0xf]
          %v441 = vld [vmem:[#allocation10 + $0xc] sm:$0xf]
          %v442 = vld [vmem:[#allocation10 + $0x10] sm:$0xf]
          %v443 = vld [vmem:[#allocation10 + $0x14] sm:$0xf]
          %v444 = vld [vmem:[#allocation10 + $0x18] sm:$0xf]
          %v445 = vld [vmem:[#allocation10 + $0x1c] sm:$0xf]
          %v446 = vld [vmem:[#allocation10 + $0x20] sm:$0xf]
          %v447 = vld [vmem:[#allocation10 + $0x24] sm:$0xf]
          %v448 = vld [vmem:[#allocation10 + $0x28] sm:$0xf]
          %v449 = vld [vmem:[#allocation10 + $0x2c] sm:$0xf]
          %v450 = vld [vmem:[#allocation10 + $0x30] sm:$0xf]
          %v451 = vld [vmem:[#allocation10 + $0x34] sm:$0xf]
          %v452 = vld [vmem:[#allocation10 + $0x38] sm:$0xf]
          %v453 = vld [vmem:[#allocation10 + $0x3c] sm:$0xf]
          %v470 = vunpack.c.l.b16 %v438
          %v471 = vunpack.c.l.b16 %v439
          %v472 = vunpack.c.l.b16 %v440
          %v473 = vunpack.c.l.b16 %v441
          %v474 = vunpack.c.l.b16 %v442
          %v475 = vunpack.c.l.b16 %v443
          %v476 = vunpack.c.l.b16 %v444
          %v477 = vunpack.c.l.b16 %v445
          %v478 = vunpack.c.l.b16 %v446
          %v479 = vunpack.c.l.b16 %v447
          %v480 = vunpack.c.l.b16 %v448
          %v481 = vunpack.c.l.b16 %v449
          %v482 = vunpack.c.l.b16 %v450
          %v483 = vunpack.c.l.b16 %v451
          %v484 = vunpack.c.l.b16 %v452
          %v485 = vunpack.c.l.b16 %v453
          %v486 = vpack.c.b16 %v471, %v470
          %v487 = vpack.c.b16 %v473, %v472
          %v488 = vpack.c.b16 %v475, %v474
          %v489 = vpack.c.b16 %v477, %v476
          %v490 = vpack.c.b16 %v479, %v478
          %v491 = vpack.c.b16 %v481, %v480
          %v492 = vpack.c.b16 %v483, %v482
          %v493 = vpack.c.b16 %v485, %v484
          %502 = vmatpush.bf16.msra.mxu0 %v493
          %503 = vmatpush.bf16.msra.mxu0 %v492
          %504 = vmatpush.bf16.msra.mxu0 %v491
          %505 = vmatpush.bf16.msra.mxu0 %v490
          %506 = vmatpush.bf16.msra.mxu0 %v489
          %507 = vmatpush.bf16.msra.mxu0 %v488
          %508 = vmatpush.bf16.msra.mxu0 %v487
          %509 = vmatpush.bf16.msra.mxu0 %v486
          %510 = vmatmul.bf16.gmra.mxu0 %v430
          %v511 = vpop.f32.mrf.mxu0
          %v512 = vadd.f32 0.0, %v511
          %v513 = vpop.f32.mrf.mxu0
          %v514 = vadd.f32 0.0, %v513
          %515 = vmatmul.bf16.gmra.mxu0 %v431
          %v516 = vpop.f32.mrf.mxu0
          %v517 = vadd.f32 0.0, %v516
          %v518 = vpop.f32.mrf.mxu0
          %v519 = vadd.f32 0.0, %v518
          %520 = vmatmul.bf16.gmra.mxu0 %v432
          %v521 = vpop.f32.mrf.mxu0
          %v522 = vadd.f32 0.0, %v521
          %v523 = vpop.f32.mrf.mxu0
          %v524 = vadd.f32 0.0, %v523
          %525 = vmatmul.bf16.gmra.mxu0 %v433
          %v526 = vpop.f32.mrf.mxu0
          %v527 = vadd.f32 0.0, %v526
          %v528 = vpop.f32.mrf.mxu0
          %v529 = vadd.f32 0.0, %v528
          %530 = vmatmul.bf16.gmra.mxu0 %v434
          %v531 = vpop.f32.mrf.mxu0
          %v532 = vadd.f32 0.0, %v531
          %v533 = vpop.f32.mrf.mxu0
          %v534 = vadd.f32 0.0, %v533
          %535 = vmatmul.bf16.gmra.mxu0 %v435
          %v536 = vpop.f32.mrf.mxu0
          %v537 = vadd.f32 0.0, %v536
          %v538 = vpop.f32.mrf.mxu0
          %v539 = vadd.f32 0.0, %v538
          %540 = vmatmul.bf16.gmra.mxu0 %v436
          %v541 = vpop.f32.mrf.mxu0
          %v542 = vadd.f32 0.0, %v541
          %v543 = vpop.f32.mrf.mxu0
          %v544 = vadd.f32 0.0, %v543
          %545 = vmatmul.bf16.gmra.mxu0 %v437
          %v546 = vpop.f32.mrf.mxu0
          %v547 = vadd.f32 0.0, %v546
          %v548 = vpop.f32.mrf.mxu0
          %v549 = vadd.f32 0.0, %v548
          %550 = vdwg.mxu0
          %551 = vst [vmem:[#allocation2] sm:$0xff] %v512
          %552 = vst [vmem:[#allocation2 + $0x8] sm:$0xff] %v514
          %553 = vst [vmem:[#allocation2 + $0x10] sm:$0xff] %v517
          %554 = vst [vmem:[#allocation2 + $0x18] sm:$0xff] %v519
          %555 = vst [vmem:[#allocation2 + $0x20] sm:$0xff] %v522
          %556 = vst [vmem:[#allocation2 + $0x28] sm:$0xff] %v524
          %557 = vst [vmem:[#allocation2 + $0x30] sm:$0xff] %v527
          %558 = vst [vmem:[#allocation2 + $0x38] sm:$0xff] %v529
          %559 = vst [vmem:[#allocation2 + $0x40] sm:$0xff] %v532
          %560 = vst [vmem:[#allocation2 + $0x48] sm:$0xff] %v534
          %561 = vst [vmem:[#allocation2 + $0x50] sm:$0xff] %v537
          %562 = vst [vmem:[#allocation2 + $0x58] sm:$0xff] %v539
          %563 = vst [vmem:[#allocation2 + $0x60] sm:$0xff] %v542
          %564 = vst [vmem:[#allocation2 + $0x68] sm:$0xff] %v544
          %565 = vst [vmem:[#allocation2 + $0x70] sm:$0xff] %v547
          %566 = vst [vmem:[#allocation2 + $0x78] sm:$0xff] %v549
          %v567 = vld [vmem:[%s346] sm:$0xff]
          %v568 = vld [vmem:[%s346 + $0x8] sm:$0xff]
          %v569 = vld [vmem:[%s346 + $0x10] sm:$0xff]
          %v570 = vld [vmem:[%s346 + $0x18] sm:$0xff]
          %v571 = vld [vmem:[%s346 + $0x20] sm:$0xff]
          %v572 = vld [vmem:[%s346 + $0x28] sm:$0xff]
          %v573 = vld [vmem:[%s346 + $0x30] sm:$0xff]
          %v574 = vld [vmem:[%s346 + $0x38] sm:$0xff]
          %v575 = vld [vmem:[%s346 + $0x40] sm:$0xff]
          %v576 = vld [vmem:[%s346 + $0x48] sm:$0xff]
          %v577 = vld [vmem:[%s346 + $0x50] sm:$0xff]
          %v578 = vld [vmem:[%s346 + $0x58] sm:$0xff]
          %v579 = vld [vmem:[%s346 + $0x60] sm:$0xff]
          %v580 = vld [vmem:[%s346 + $0x68] sm:$0xff]
          %v581 = vld [vmem:[%s346 + $0x70] sm:$0xff]
          %v582 = vld [vmem:[%s346 + $0x78] sm:$0xff]
          %583 = vst [vmem:[#allocation3] sm:$0xff] %v567
          %584 = vst [vmem:[#allocation3 + $0x8] sm:$0xff] %v568
          %585 = vst [vmem:[#allocation3 + $0x10] sm:$0xff] %v569
          %586 = vst [vmem:[#allocation3 + $0x18] sm:$0xff] %v570
          %587 = vst [vmem:[#allocation3 + $0x20] sm:$0xff] %v571
          %588 = vst [vmem:[#allocation3 + $0x28] sm:$0xff] %v572
          %589 = vst [vmem:[#allocation3 + $0x30] sm:$0xff] %v573
          %590 = vst [vmem:[#allocation3 + $0x38] sm:$0xff] %v574
          %591 = vst [vmem:[#allocation3 + $0x40] sm:$0xff] %v575
          %592 = vst [vmem:[#allocation3 + $0x48] sm:$0xff] %v576
          %593 = vst [vmem:[#allocation3 + $0x50] sm:$0xff] %v577
          %594 = vst [vmem:[#allocation3 + $0x58] sm:$0xff] %v578
          %595 = vst [vmem:[#allocation3 + $0x60] sm:$0xff] %v579
          %596 = vst [vmem:[#allocation3 + $0x68] sm:$0xff] %v580
          %597 = vst [vmem:[#allocation3 + $0x70] sm:$0xff] %v581
          %598 = vst [vmem:[#allocation3 + $0x78] sm:$0xff] %v582
        $region68: #{tpu_custom_call.1} parent=43 // pred_fallthru
          _
        %v599 = vld [vmem:[%s356] sm:$0xf]
        %v600 = vld [vmem:[%s356 + $0x4] sm:$0xf]
        %v601 = vld [vmem:[%s356 + $0x8] sm:$0xf]
        %v602 = vld [vmem:[%s356 + $0xc] sm:$0xf]
        %v603 = vld [vmem:[%s356 + $0x10] sm:$0xf]
        %v604 = vld [vmem:[%s356 + $0x14] sm:$0xf]
        %v605 = vld [vmem:[%s356 + $0x18] sm:$0xf]
        %v606 = vld [vmem:[%s356 + $0x1c] sm:$0xf]
        %v607 = vld [vmem:[%s356 + $0x20] sm:$0xf]
        %v608 = vld [vmem:[%s356 + $0x24] sm:$0xf]
        %v609 = vld [vmem:[%s356 + $0x28] sm:$0xf]
        %v610 = vld [vmem:[%s356 + $0x2c] sm:$0xf]
        %v611 = vld [vmem:[%s356 + $0x30] sm:$0xf]
        %v612 = vld [vmem:[%s356 + $0x34] sm:$0xf]
        %v613 = vld [vmem:[%s356 + $0x38] sm:$0xf]
        %v614 = vld [vmem:[%s356 + $0x3c] sm:$0xf]
        %v615 = vld [vmem:[%s356 + $0x40] sm:$0xf]
        %v616 = vld [vmem:[%s356 + $0x44] sm:$0xf]
        %v617 = vld [vmem:[%s356 + $0x48] sm:$0xf]
        %v618 = vld [vmem:[%s356 + $0x4c] sm:$0xf]
        %v619 = vld [vmem:[%s356 + $0x50] sm:$0xf]
        %v620 = vld [vmem:[%s356 + $0x54] sm:$0xf]
        %v621 = vld [vmem:[%s356 + $0x58] sm:$0xf]
        %v622 = vld [vmem:[%s356 + $0x5c] sm:$0xf]
        %v623 = vld [vmem:[%s356 + $0x60] sm:$0xf]
        %v624 = vld [vmem:[%s356 + $0x64] sm:$0xf]
        %v625 = vld [vmem:[%s356 + $0x68] sm:$0xf]
        %v626 = vld [vmem:[%s356 + $0x6c] sm:$0xf]
        %v627 = vld [vmem:[%s356 + $0x70] sm:$0xf]
        %v628 = vld [vmem:[%s356 + $0x74] sm:$0xf]
        %v629 = vld [vmem:[%s356 + $0x78] sm:$0xf]
        %v630 = vld [vmem:[%s356 + $0x7c] sm:$0xf]
        %v631 = vld [vmem:[#allocation11] sm:$0xf]
        %v632 = vld [vmem:[#allocation11 + $0x4] sm:$0xf]
        %v633 = vld [vmem:[#allocation11 + $0x8] sm:$0xf]
        %v634 = vld [vmem:[#allocation11 + $0xc] sm:$0xf]
        %v635 = vld [vmem:[#allocation11 + $0x10] sm:$0xf]
        %v636 = vld [vmem:[#allocation11 + $0x14] sm:$0xf]
        %v637 = vld [vmem:[#allocation11 + $0x18] sm:$0xf]
        %v638 = vld [vmem:[#allocation11 + $0x1c] sm:$0xf]
        %v639 = vld [vmem:[#allocation11 + $0x20] sm:$0xf]
        %v640 = vld [vmem:[#allocation11 + $0x24] sm:$0xf]
        %v641 = vld [vmem:[#allocation11 + $0x28] sm:$0xf]
        %v642 = vld [vmem:[#allocation11 + $0x2c] sm:$0xf]
        %v643 = vld [vmem:[#allocation11 + $0x30] sm:$0xf]
        %v644 = vld [vmem:[#allocation11 + $0x34] sm:$0xf]
        %v645 = vld [vmem:[#allocation11 + $0x38] sm:$0xf]
        %v646 = vld [vmem:[#allocation11 + $0x3c] sm:$0xf]
        %v679 = vunpack.c.l.b16 %v599
        %v680 = vunpack.c.l.b16 %v600
        %v681 = vunpack.c.l.b16 %v601
        %v682 = vunpack.c.l.b16 %v602
        %v683 = vunpack.c.l.b16 %v603
        %v684 = vunpack.c.l.b16 %v604
        %v685 = vunpack.c.l.b16 %v605
        %v686 = vunpack.c.l.b16 %v606
        %v687 = vunpack.c.l.b16 %v607
        %v688 = vunpack.c.l.b16 %v608
        %v689 = vunpack.c.l.b16 %v609
        %v690 = vunpack.c.l.b16 %v610
        %v691 = vunpack.c.l.b16 %v611
        %v692 = vunpack.c.l.b16 %v612
        %v693 = vunpack.c.l.b16 %v613
        %v694 = vunpack.c.l.b16 %v614
        %v695 = vunpack.c.l.b16 %v615
        %v696 = vunpack.c.l.b16 %v616
        %v697 = vunpack.c.l.b16 %v617
        %v698 = vunpack.c.l.b16 %v618
        %v699 = vunpack.c.l.b16 %v619
        %v700 = vunpack.c.l.b16 %v620
        %v701 = vunpack.c.l.b16 %v621
        %v702 = vunpack.c.l.b16 %v622
        %v703 = vunpack.c.l.b16 %v623
        %v704 = vunpack.c.l.b16 %v624
        %v705 = vunpack.c.l.b16 %v625
        %v706 = vunpack.c.l.b16 %v626
        %v707 = vunpack.c.l.b16 %v627
        %v708 = vunpack.c.l.b16 %v628
        %v709 = vunpack.c.l.b16 %v629
        %v710 = vunpack.c.l.b16 %v630
        %v711 = vpack.c.b16 %v680, %v679
        %v712 = vpack.c.b16 %v682, %v681
        %v713 = vpack.c.b16 %v684, %v683
        %v714 = vpack.c.b16 %v686, %v685
        %v715 = vpack.c.b16 %v688, %v687
        %v716 = vpack.c.b16 %v690, %v689
        %v717 = vpack.c.b16 %v692, %v691
        %v718 = vpack.c.b16 %v694, %v693
        %v719 = vpack.c.b16 %v696, %v695
        %v720 = vpack.c.b16 %v698, %v697
        %v721 = vpack.c.b16 %v700, %v699
        %v722 = vpack.c.b16 %v702, %v701
        %v723 = vpack.c.b16 %v704, %v703
        %v724 = vpack.c.b16 %v706, %v705
        %v725 = vpack.c.b16 %v708, %v707
        %v726 = vpack.c.b16 %v710, %v709
        %v759 = vunpack.c.l.b16 %v631
        %v760 = vunpack.c.l.b16 %v632
        %v761 = vunpack.c.l.b16 %v633
        %v762 = vunpack.c.l.b16 %v634
        %v763 = vunpack.c.l.b16 %v635
        %v764 = vunpack.c.l.b16 %v636
        %v765 = vunpack.c.l.b16 %v637
        %v766 = vunpack.c.l.b16 %v638
        %v767 = vunpack.c.l.b16 %v639
        %v768 = vunpack.c.l.b16 %v640
        %v769 = vunpack.c.l.b16 %v641
        %v770 = vunpack.c.l.b16 %v642
        %v771 = vunpack.c.l.b16 %v643
        %v772 = vunpack.c.l.b16 %v644
        %v773 = vunpack.c.l.b16 %v645
        %v774 = vunpack.c.l.b16 %v646
        %v775 = vpack.c.b16 %v760, %v759
        %v776 = vpack.c.b16 %v762, %v761
        %v777 = vpack.c.b16 %v764, %v763
        %v778 = vpack.c.b16 %v766, %v765
        %v779 = vpack.c.b16 %v768, %v767
        %v780 = vpack.c.b16 %v770, %v769
        %v781 = vpack.c.b16 %v772, %v771
        %v782 = vpack.c.b16 %v774, %v773
        %791 = vmatpush.bf16.msra.mxu0 %v782
        %792 = vmatpush.bf16.msra.mxu0 %v781
        %793 = vmatpush.bf16.msra.mxu0 %v780
        %794 = vmatpush.bf16.msra.mxu0 %v779
        %795 = vmatpush.bf16.msra.mxu0 %v778
        %796 = vmatpush.bf16.msra.mxu0 %v777
        %797 = vmatpush.bf16.msra.mxu0 %v776
        %798 = vmatpush.bf16.msra.mxu0 %v775
        %799 = vmatmul.bf16.gmra.mxu0 %v711
        %v800 = vpop.f32.mrf.mxu0
        %v801 = vadd.f32 0.0, %v800
        %v802 = vpop.f32.mrf.mxu0
        %v803 = vadd.f32 0.0, %v802
        %804 = vmatmul.bf16.gmra.mxu0 %v712
        %v805 = vpop.f32.mrf.mxu0
        %v806 = vadd.f32 0.0, %v805
        %v807 = vpop.f32.mrf.mxu0
        %v808 = vadd.f32 0.0, %v807
        %809 = vmatmul.bf16.gmra.mxu0 %v713
        %v810 = vpop.f32.mrf.mxu0
        %v811 = vadd.f32 0.0, %v810
        %v812 = vpop.f32.mrf.mxu0
        %v813 = vadd.f32 0.0, %v812
        %814 = vmatmul.bf16.gmra.mxu0 %v714
        %v815 = vpop.f32.mrf.mxu0
        %v816 = vadd.f32 0.0, %v815
        %v817 = vpop.f32.mrf.mxu0
        %v818 = vadd.f32 0.0, %v817
        %819 = vmatmul.bf16.gmra.mxu0 %v715
        %v820 = vpop.f32.mrf.mxu0
        %v821 = vadd.f32 0.0, %v820
        %v822 = vpop.f32.mrf.mxu0
        %v823 = vadd.f32 0.0, %v822
        %824 = vmatmul.bf16.gmra.mxu0 %v716
        %v825 = vpop.f32.mrf.mxu0
        %v826 = vadd.f32 0.0, %v825
        %v827 = vpop.f32.mrf.mxu0
        %v828 = vadd.f32 0.0, %v827
        %829 = vmatmul.bf16.gmra.mxu0 %v717
        %v830 = vpop.f32.mrf.mxu0
        %v831 = vadd.f32 0.0, %v830
        %v832 = vpop.f32.mrf.mxu0
        %v833 = vadd.f32 0.0, %v832
        %834 = vmatmul.bf16.gmra.mxu0 %v718
        %v835 = vpop.f32.mrf.mxu0
        %v836 = vadd.f32 0.0, %v835
        %v837 = vpop.f32.mrf.mxu0
        %v838 = vadd.f32 0.0, %v837
        %839 = vmatmul.bf16.gmra.mxu0 %v719
        %v840 = vpop.f32.mrf.mxu0
        %v841 = vadd.f32 0.0, %v840
        %v842 = vpop.f32.mrf.mxu0
        %v843 = vadd.f32 0.0, %v842
        %844 = vmatmul.bf16.gmra.mxu0 %v720
        %v845 = vpop.f32.mrf.mxu0
        %v846 = vadd.f32 0.0, %v845
        %v847 = vpop.f32.mrf.mxu0
        %v848 = vadd.f32 0.0, %v847
        %849 = vmatmul.bf16.gmra.mxu0 %v721
        %v850 = vpop.f32.mrf.mxu0
        %v851 = vadd.f32 0.0, %v850
        %v852 = vpop.f32.mrf.mxu0
        %v853 = vadd.f32 0.0, %v852
        %854 = vmatmul.bf16.gmra.mxu0 %v722
        %v855 = vpop.f32.mrf.mxu0
        %v856 = vadd.f32 0.0, %v855
        %v857 = vpop.f32.mrf.mxu0
        %v858 = vadd.f32 0.0, %v857
        %859 = vmatmul.bf16.gmra.mxu0 %v723
        %v860 = vpop.f32.mrf.mxu0
        %v861 = vadd.f32 0.0, %v860
        %v862 = vpop.f32.mrf.mxu0
        %v863 = vadd.f32 0.0, %v862
        %864 = vmatmul.bf16.gmra.mxu0 %v724
        %v865 = vpop.f32.mrf.mxu0
        %v866 = vadd.f32 0.0, %v865
        %v867 = vpop.f32.mrf.mxu0
        %v868 = vadd.f32 0.0, %v867
        %869 = vmatmul.bf16.gmra.mxu0 %v725
        %v870 = vpop.f32.mrf.mxu0
        %v871 = vadd.f32 0.0, %v870
        %v872 = vpop.f32.mrf.mxu0
        %v873 = vadd.f32 0.0, %v872
        %874 = vmatmul.bf16.gmra.mxu0 %v726
        %v875 = vpop.f32.mrf.mxu0
        %v876 = vadd.f32 0.0, %v875
        %v877 = vpop.f32.mrf.mxu0
        %v878 = vadd.f32 0.0, %v877
        %879 = vdwg.mxu0
        %v880 = vld [vmem:[#allocation2] sm:$0xff]
        %v881 = vld [vmem:[#allocation2 + $0x8] sm:$0xff]
        %v882 = vld [vmem:[#allocation2 + $0x10] sm:$0xff]
        %v883 = vld [vmem:[#allocation2 + $0x18] sm:$0xff]
        %v884 = vld [vmem:[#allocation2 + $0x20] sm:$0xff]
        %v885 = vld [vmem:[#allocation2 + $0x28] sm:$0xff]
        %v886 = vld [vmem:[#allocation2 + $0x30] sm:$0xff]
        %v887 = vld [vmem:[#allocation2 + $0x38] sm:$0xff]
        %v888 = vld [vmem:[#allocation2 + $0x40] sm:$0xff]
        %v889 = vld [vmem:[#allocation2 + $0x48] sm:$0xff]
        %v890 = vld [vmem:[#allocation2 + $0x50] sm:$0xff]
        %v891 = vld [vmem:[#allocation2 + $0x58] sm:$0xff]
        %v892 = vld [vmem:[#allocation2 + $0x60] sm:$0xff]
        %v893 = vld [vmem:[#allocation2 + $0x68] sm:$0xff]
        %v894 = vld [vmem:[#allocation2 + $0x70] sm:$0xff]
        %v895 = vld [vmem:[#allocation2 + $0x78] sm:$0xff]
        %v896 = vadd.f32 %v801, %v880
        %v897 = vadd.f32 %v803, %v881
        %v898 = vadd.f32 %v806, %v882
        %v899 = vadd.f32 %v808, %v883
        %v900 = vadd.f32 %v811, %v884
        %v901 = vadd.f32 %v813, %v885
        %v902 = vadd.f32 %v816, %v886
        %v903 = vadd.f32 %v818, %v887
        %v904 = vadd.f32 %v821, %v888
        %v905 = vadd.f32 %v823, %v889
        %v906 = vadd.f32 %v826, %v890
        %v907 = vadd.f32 %v828, %v891
        %v908 = vadd.f32 %v831, %v892
        %v909 = vadd.f32 %v833, %v893
        %v910 = vadd.f32 %v836, %v894
        %v911 = vadd.f32 %v838, %v895
        %v912 = vadd.f32 %v841, %v880
        %v913 = vadd.f32 %v843, %v881
        %v914 = vadd.f32 %v846, %v882
        %v915 = vadd.f32 %v848, %v883
        %v916 = vadd.f32 %v851, %v884
        %v917 = vadd.f32 %v853, %v885
        %v918 = vadd.f32 %v856, %v886
        %v919 = vadd.f32 %v858, %v887
        %v920 = vadd.f32 %v861, %v888
        %v921 = vadd.f32 %v863, %v889
        %v922 = vadd.f32 %v866, %v890
        %v923 = vadd.f32 %v868, %v891
        %v924 = vadd.f32 %v871, %v892
        %v925 = vadd.f32 %v873, %v893
        %v926 = vadd.f32 %v876, %v894
        %v927 = vadd.f32 %v878, %v895
        %v928 = vmul.f32 %v896, 0.5
        %v929 = vmul.f32 %v897, 0.5
        %v930 = vmul.f32 %v898, 0.5
        %v931 = vmul.f32 %v899, 0.5
        %v932 = vmul.f32 %v900, 0.5
        %v933 = vmul.f32 %v901, 0.5
        %v934 = vmul.f32 %v902, 0.5
        %v935 = vmul.f32 %v903, 0.5
        %v936 = vmul.f32 %v904, 0.5
        %v937 = vmul.f32 %v905, 0.5
        %v938 = vmul.f32 %v906, 0.5
        %v939 = vmul.f32 %v907, 0.5
        %v940 = vmul.f32 %v908, 0.5
        %v941 = vmul.f32 %v909, 0.5
        %v942 = vmul.f32 %v910, 0.5
        %v943 = vmul.f32 %v911, 0.5
        %v944 = vmul.f32 %v912, 0.5
        %v945 = vmul.f32 %v913, 0.5
        %v946 = vmul.f32 %v914, 0.5
        %v947 = vmul.f32 %v915, 0.5
        %v948 = vmul.f32 %v916, 0.5
        %v949 = vmul.f32 %v917, 0.5
        %v950 = vmul.f32 %v918, 0.5
        %v951 = vmul.f32 %v919, 0.5
        %v952 = vmul.f32 %v920, 0.5
        %v953 = vmul.f32 %v921, 0.5
        %v954 = vmul.f32 %v922, 0.5
        %v955 = vmul.f32 %v923, 0.5
        %v956 = vmul.f32 %v924, 0.5
        %v957 = vmul.f32 %v925, 0.5
        %v958 = vmul.f32 %v926, 0.5
        %v959 = vmul.f32 %v927, 0.5
        %v960 = vtanh.pop %v928
        %v961 = vtanh.pop %v929
        %v962 = vtanh.pop %v930
        %v963 = vtanh.pop %v931
        %v964 = vtanh.pop %v932
        %v965 = vtanh.pop %v933
        %v966 = vtanh.pop %v934
        %v967 = vtanh.pop %v935
        %v968 = vtanh.pop %v936
        %v969 = vtanh.pop %v937
        %v970 = vtanh.pop %v938
        %v971 = vtanh.pop %v939
        %v972 = vtanh.pop %v940
        %v973 = vtanh.pop %v941
        %v974 = vtanh.pop %v942
        %v975 = vtanh.pop %v943
        %v976 = vtanh.pop %v944
        %v977 = vtanh.pop %v945
        %v978 = vtanh.pop %v946
        %v979 = vtanh.pop %v947
        %v980 = vtanh.pop %v948
        %v981 = vtanh.pop %v949
        %v982 = vtanh.pop %v950
        %v983 = vtanh.pop %v951
        %v984 = vtanh.pop %v952
        %v985 = vtanh.pop %v953
        %v986 = vtanh.pop %v954
        %v987 = vtanh.pop %v955
        %v988 = vtanh.pop %v956
        %v989 = vtanh.pop %v957
        %v990 = vtanh.pop %v958
        %v991 = vtanh.pop %v959
        %v992 = vmul.f32 %v960, 0.5
        %v993 = vmul.f32 %v961, 0.5
        %v994 = vmul.f32 %v962, 0.5
        %v995 = vmul.f32 %v963, 0.5
        %v996 = vmul.f32 %v964, 0.5
        %v997 = vmul.f32 %v965, 0.5
        %v998 = vmul.f32 %v966, 0.5
        %v999 = vmul.f32 %v967, 0.5
        %v1000 = vmul.f32 %v968, 0.5
        %v1001 = vmul.f32 %v969, 0.5
        %v1002 = vmul.f32 %v970, 0.5
        %v1003 = vmul.f32 %v971, 0.5
        %v1004 = vmul.f32 %v972, 0.5
        %v1005 = vmul.f32 %v973, 0.5
        %v1006 = vmul.f32 %v974, 0.5
        %v1007 = vmul.f32 %v975, 0.5
        %v1008 = vmul.f32 %v976, 0.5
        %v1009 = vmul.f32 %v977, 0.5
        %v1010 = vmul.f32 %v978, 0.5
        %v1011 = vmul.f32 %v979, 0.5
        %v1012 = vmul.f32 %v980, 0.5
        %v1013 = vmul.f32 %v981, 0.5
        %v1014 = vmul.f32 %v982, 0.5
        %v1015 = vmul.f32 %v983, 0.5
        %v1016 = vmul.f32 %v984, 0.5
        %v1017 = vmul.f32 %v985, 0.5
        %v1018 = vmul.f32 %v986, 0.5
        %v1019 = vmul.f32 %v987, 0.5
        %v1020 = vmul.f32 %v988, 0.5
        %v1021 = vmul.f32 %v989, 0.5
        %v1022 = vmul.f32 %v990, 0.5
        %v1023 = vmul.f32 %v991, 0.5
        %v1024 = vadd.f32 %v992, 0.5
        %v1025 = vadd.f32 %v993, 0.5
        %v1026 = vadd.f32 %v994, 0.5
        %v1027 = vadd.f32 %v995, 0.5
        %v1028 = vadd.f32 %v996, 0.5
        %v1029 = vadd.f32 %v997, 0.5
        %v1030 = vadd.f32 %v998, 0.5
        %v1031 = vadd.f32 %v999, 0.5
        %v1032 = vadd.f32 %v1000, 0.5
        %v1033 = vadd.f32 %v1001, 0.5
        %v1034 = vadd.f32 %v1002, 0.5
        %v1035 = vadd.f32 %v1003, 0.5
        %v1036 = vadd.f32 %v1004, 0.5
        %v1037 = vadd.f32 %v1005, 0.5
        %v1038 = vadd.f32 %v1006, 0.5
        %v1039 = vadd.f32 %v1007, 0.5
        %v1040 = vadd.f32 %v1008, 0.5
        %v1041 = vadd.f32 %v1009, 0.5
        %v1042 = vadd.f32 %v1010, 0.5
        %v1043 = vadd.f32 %v1011, 0.5
        %v1044 = vadd.f32 %v1012, 0.5
        %v1045 = vadd.f32 %v1013, 0.5
        %v1046 = vadd.f32 %v1014, 0.5
        %v1047 = vadd.f32 %v1015, 0.5
        %v1048 = vadd.f32 %v1016, 0.5
        %v1049 = vadd.f32 %v1017, 0.5
        %v1050 = vadd.f32 %v1018, 0.5
        %v1051 = vadd.f32 %v1019, 0.5
        %v1052 = vadd.f32 %v1020, 0.5
        %v1053 = vadd.f32 %v1021, 0.5
        %v1054 = vadd.f32 %v1022, 0.5
        %v1055 = vadd.f32 %v1023, 0.5
        %s1056 = smul.u32 %s33, 2
        %v1057 = vstv %s1056
        %v1058 = vadd.s32 %v1057, 1
        %v1059 = vlaneseq
        %v1060 = vshrl.u32 %v1059, 7
        %v1061 = vadd.s32 %v1060, 8
        %v1062 = vadd.s32 %v1060, 16
        %v1063 = vadd.s32 %v1060, 24
        %v1064 = vadd.s32 %v1060, 32
        %v1065 = vadd.s32 %v1060, 40
        %v1066 = vadd.s32 %v1060, 48
        %v1067 = vadd.s32 %v1060, 56
        %v1068 = vadd.s32 %v1060, 64
        %v1069 = vadd.s32 %v1060, 72
        %v1070 = vadd.s32 %v1060, 80
        %v1071 = vadd.s32 %v1060, 88
        %v1072 = vadd.s32 %v1060, 96
        %v1073 = vadd.s32 %v1060, 104
        %v1074 = vadd.s32 %v1060, 112
        %v1075 = vadd.s32 %v1060, 120
        %s1076 = smul.u32 %s32, 128
        %v1077 = vstv %s1076
        %v1078 = vadd.s32 %v1060, %v1077
        %v1079 = vadd.s32 %v1061, %v1077
        %v1080 = vadd.s32 %v1062, %v1077
        %v1081 = vadd.s32 %v1063, %v1077
        %v1082 = vadd.s32 %v1064, %v1077
        %v1083 = vadd.s32 %v1065, %v1077
        %v1084 = vadd.s32 %v1066, %v1077
        %v1085 = vadd.s32 %v1067, %v1077
        %v1086 = vadd.s32 %v1068, %v1077
        %v1087 = vadd.s32 %v1069, %v1077
        %v1088 = vadd.s32 %v1070, %v1077
        %v1089 = vadd.s32 %v1071, %v1077
        %v1090 = vadd.s32 %v1072, %v1077
        %v1091 = vadd.s32 %v1073, %v1077
        %v1092 = vadd.s32 %v1074, %v1077
        %v1093 = vadd.s32 %v1075, %v1077
        %v1094 = vlaneseq
        %v1095 = vand.u32 %v1094, 127
        %v1096 = vmul.u32 %v1057, 2654435761
        %v1097 = vmul.u32 %v1058, 2654435761
        %v1098 = vmul.u32 %v1078, 2246822519
        %v1099 = vmul.u32 %v1079, 2246822519
        %v1100 = vmul.u32 %v1080, 2246822519
        %v1101 = vmul.u32 %v1081, 2246822519
        %v1102 = vmul.u32 %v1082, 2246822519
        %v1103 = vmul.u32 %v1083, 2246822519
        %v1104 = vmul.u32 %v1084, 2246822519
        %v1105 = vmul.u32 %v1085, 2246822519
        %v1106 = vmul.u32 %v1086, 2246822519
        %v1107 = vmul.u32 %v1087, 2246822519
        %v1108 = vmul.u32 %v1088, 2246822519
        %v1109 = vmul.u32 %v1089, 2246822519
        %v1110 = vmul.u32 %v1090, 2246822519
        %v1111 = vmul.u32 %v1091, 2246822519
        %v1112 = vmul.u32 %v1092, 2246822519
        %v1113 = vmul.u32 %v1093, 2246822519
        %v1114 = vxor.u32 %v1096, %v1098
        %v1115 = vxor.u32 %v1096, %v1099
        %v1116 = vxor.u32 %v1096, %v1100
        %v1117 = vxor.u32 %v1096, %v1101
        %v1118 = vxor.u32 %v1096, %v1102
        %v1119 = vxor.u32 %v1096, %v1103
        %v1120 = vxor.u32 %v1096, %v1104
        %v1121 = vxor.u32 %v1096, %v1105
        %v1122 = vxor.u32 %v1096, %v1106
        %v1123 = vxor.u32 %v1096, %v1107
        %v1124 = vxor.u32 %v1096, %v1108
        %v1125 = vxor.u32 %v1096, %v1109
        %v1126 = vxor.u32 %v1096, %v1110
        %v1127 = vxor.u32 %v1096, %v1111
        %v1128 = vxor.u32 %v1096, %v1112
        %v1129 = vxor.u32 %v1096, %v1113
        %v1130 = vxor.u32 %v1097, %v1098
        %v1131 = vxor.u32 %v1097, %v1099
        %v1132 = vxor.u32 %v1097, %v1100
        %v1133 = vxor.u32 %v1097, %v1101
        %v1134 = vxor.u32 %v1097, %v1102
        %v1135 = vxor.u32 %v1097, %v1103
        %v1136 = vxor.u32 %v1097, %v1104
        %v1137 = vxor.u32 %v1097, %v1105
        %v1138 = vxor.u32 %v1097, %v1106
        %v1139 = vxor.u32 %v1097, %v1107
        %v1140 = vxor.u32 %v1097, %v1108
        %v1141 = vxor.u32 %v1097, %v1109
        %v1142 = vxor.u32 %v1097, %v1110
        %v1143 = vxor.u32 %v1097, %v1111
        %v1144 = vxor.u32 %v1097, %v1112
        %v1145 = vxor.u32 %v1097, %v1113
        %v1146 = vmul.u32 %v1095, 3266489917
        %v1147 = vxor.u32 %v1114, %v1146
        %v1148 = vxor.u32 %v1115, %v1146
        %v1149 = vxor.u32 %v1116, %v1146
        %v1150 = vxor.u32 %v1117, %v1146
        %v1151 = vxor.u32 %v1118, %v1146
        %v1152 = vxor.u32 %v1119, %v1146
        %v1153 = vxor.u32 %v1120, %v1146
        %v1154 = vxor.u32 %v1121, %v1146
        %v1155 = vxor.u32 %v1122, %v1146
        %v1156 = vxor.u32 %v1123, %v1146
        %v1157 = vxor.u32 %v1124, %v1146
        %v1158 = vxor.u32 %v1125, %v1146
        %v1159 = vxor.u32 %v1126, %v1146
        %v1160 = vxor.u32 %v1127, %v1146
        %v1161 = vxor.u32 %v1128, %v1146
        %v1162 = vxor.u32 %v1129, %v1146
        %v1163 = vxor.u32 %v1130, %v1146
        %v1164 = vxor.u32 %v1131, %v1146
        %v1165 = vxor.u32 %v1132, %v1146
        %v1166 = vxor.u32 %v1133, %v1146
        %v1167 = vxor.u32 %v1134, %v1146
        %v1168 = vxor.u32 %v1135, %v1146
        %v1169 = vxor.u32 %v1136, %v1146
        %v1170 = vxor.u32 %v1137, %v1146
        %v1171 = vxor.u32 %v1138, %v1146
        %v1172 = vxor.u32 %v1139, %v1146
        %v1173 = vxor.u32 %v1140, %v1146
        %v1174 = vxor.u32 %v1141, %v1146
        %v1175 = vxor.u32 %v1142, %v1146
        %v1176 = vxor.u32 %v1143, %v1146
        %v1177 = vxor.u32 %v1144, %v1146
        %v1178 = vxor.u32 %v1145, %v1146
        %s1179 = sld [smem:[#allocation4]]
        %v1180 = vstv %s1179
        %v1181 = vxor.u32 %v1147, %v1180
        %v1182 = vxor.u32 %v1148, %v1180
        %v1183 = vxor.u32 %v1149, %v1180
        %v1184 = vxor.u32 %v1150, %v1180
        %v1185 = vxor.u32 %v1151, %v1180
        %v1186 = vxor.u32 %v1152, %v1180
        %v1187 = vxor.u32 %v1153, %v1180
        %v1188 = vxor.u32 %v1154, %v1180
        %v1189 = vxor.u32 %v1155, %v1180
        %v1190 = vxor.u32 %v1156, %v1180
        %v1191 = vxor.u32 %v1157, %v1180
        %v1192 = vxor.u32 %v1158, %v1180
        %v1193 = vxor.u32 %v1159, %v1180
        %v1194 = vxor.u32 %v1160, %v1180
        %v1195 = vxor.u32 %v1161, %v1180
        %v1196 = vxor.u32 %v1162, %v1180
        %v1197 = vxor.u32 %v1163, %v1180
        %v1198 = vxor.u32 %v1164, %v1180
        %v1199 = vxor.u32 %v1165, %v1180
        %v1200 = vxor.u32 %v1166, %v1180
        %v1201 = vxor.u32 %v1167, %v1180
        %v1202 = vxor.u32 %v1168, %v1180
        %v1203 = vxor.u32 %v1169, %v1180
        %v1204 = vxor.u32 %v1170, %v1180
        %v1205 = vxor.u32 %v1171, %v1180
        %v1206 = vxor.u32 %v1172, %v1180
        %v1207 = vxor.u32 %v1173, %v1180
        %v1208 = vxor.u32 %v1174, %v1180
        %v1209 = vxor.u32 %v1175, %v1180
        %v1210 = vxor.u32 %v1176, %v1180
        %v1211 = vxor.u32 %v1177, %v1180
        %v1212 = vxor.u32 %v1178, %v1180
        %v1213 = vshrl.u32 %v1181, 16
        %v1214 = vshrl.u32 %v1182, 16
        %v1215 = vshrl.u32 %v1183, 16
        %v1216 = vshrl.u32 %v1184, 16
        %v1217 = vshrl.u32 %v1185, 16
        %v1218 = vshrl.u32 %v1186, 16
        %v1219 = vshrl.u32 %v1187, 16
        %v1220 = vshrl.u32 %v1188, 16
        %v1221 = vshrl.u32 %v1189, 16
        %v1222 = vshrl.u32 %v1190, 16
        %v1223 = vshrl.u32 %v1191, 16
        %v1224 = vshrl.u32 %v1192, 16
        %v1225 = vshrl.u32 %v1193, 16
        %v1226 = vshrl.u32 %v1194, 16
        %v1227 = vshrl.u32 %v1195, 16
        %v1228 = vshrl.u32 %v1196, 16
        %v1229 = vshrl.u32 %v1197, 16
        %v1230 = vshrl.u32 %v1198, 16
        %v1231 = vshrl.u32 %v1199, 16
        %v1232 = vshrl.u32 %v1200, 16
        %v1233 = vshrl.u32 %v1201, 16
        %v1234 = vshrl.u32 %v1202, 16
        %v1235 = vshrl.u32 %v1203, 16
        %v1236 = vshrl.u32 %v1204, 16
        %v1237 = vshrl.u32 %v1205, 16
        %v1238 = vshrl.u32 %v1206, 16
        %v1239 = vshrl.u32 %v1207, 16
        %v1240 = vshrl.u32 %v1208, 16
        %v1241 = vshrl.u32 %v1209, 16
        %v1242 = vshrl.u32 %v1210, 16
        %v1243 = vshrl.u32 %v1211, 16
        %v1244 = vshrl.u32 %v1212, 16
        %v1245 = vxor.u32 %v1181, %v1213
        %v1246 = vxor.u32 %v1182, %v1214
        %v1247 = vxor.u32 %v1183, %v1215
        %v1248 = vxor.u32 %v1184, %v1216
        %v1249 = vxor.u32 %v1185, %v1217
        %v1250 = vxor.u32 %v1186, %v1218
        %v1251 = vxor.u32 %v1187, %v1219
        %v1252 = vxor.u32 %v1188, %v1220
        %v1253 = vxor.u32 %v1189, %v1221
        %v1254 = vxor.u32 %v1190, %v1222
        %v1255 = vxor.u32 %v1191, %v1223
        %v1256 = vxor.u32 %v1192, %v1224
        %v1257 = vxor.u32 %v1193, %v1225
        %v1258 = vxor.u32 %v1194, %v1226
        %v1259 = vxor.u32 %v1195, %v1227
        %v1260 = vxor.u32 %v1196, %v1228
        %v1261 = vxor.u32 %v1197, %v1229
        %v1262 = vxor.u32 %v1198, %v1230
        %v1263 = vxor.u32 %v1199, %v1231
        %v1264 = vxor.u32 %v1200, %v1232
        %v1265 = vxor.u32 %v1201, %v1233
        %v1266 = vxor.u32 %v1202, %v1234
        %v1267 = vxor.u32 %v1203, %v1235
        %v1268 = vxor.u32 %v1204, %v1236
        %v1269 = vxor.u32 %v1205, %v1237
        %v1270 = vxor.u32 %v1206, %v1238
        %v1271 = vxor.u32 %v1207, %v1239
        %v1272 = vxor.u32 %v1208, %v1240
        %v1273 = vxor.u32 %v1209, %v1241
        %v1274 = vxor.u32 %v1210, %v1242
        %v1275 = vxor.u32 %v1211, %v1243
        %v1276 = vxor.u32 %v1212, %v1244
        %v1277 = vmul.u32 %v1245, 2146121005
        %v1278 = vmul.u32 %v1246, 2146121005
        %v1279 = vmul.u32 %v1247, 2146121005
        %v1280 = vmul.u32 %v1248, 2146121005
        %v1281 = vmul.u32 %v1249, 2146121005
        %v1282 = vmul.u32 %v1250, 2146121005
        %v1283 = vmul.u32 %v1251, 2146121005
        %v1284 = vmul.u32 %v1252, 2146121005
        %v1285 = vmul.u32 %v1253, 2146121005
        %v1286 = vmul.u32 %v1254, 2146121005
        %v1287 = vmul.u32 %v1255, 2146121005
        %v1288 = vmul.u32 %v1256, 2146121005
        %v1289 = vmul.u32 %v1257, 2146121005
        %v1290 = vmul.u32 %v1258, 2146121005
        %v1291 = vmul.u32 %v1259, 2146121005
        %v1292 = vmul.u32 %v1260, 2146121005
        %v1293 = vmul.u32 %v1261, 2146121005
        %v1294 = vmul.u32 %v1262, 2146121005
        %v1295 = vmul.u32 %v1263, 2146121005
        %v1296 = vmul.u32 %v1264, 2146121005
        %v1297 = vmul.u32 %v1265, 2146121005
        %v1298 = vmul.u32 %v1266, 2146121005
        %v1299 = vmul.u32 %v1267, 2146121005
        %v1300 = vmul.u32 %v1268, 2146121005
        %v1301 = vmul.u32 %v1269, 2146121005
        %v1302 = vmul.u32 %v1270, 2146121005
        %v1303 = vmul.u32 %v1271, 2146121005
        %v1304 = vmul.u32 %v1272, 2146121005
        %v1305 = vmul.u32 %v1273, 2146121005
        %v1306 = vmul.u32 %v1274, 2146121005
        %v1307 = vmul.u32 %v1275, 2146121005
        %v1308 = vmul.u32 %v1276, 2146121005
        %v1309 = vshrl.u32 %v1277, 15
        %v1310 = vshrl.u32 %v1278, 15
        %v1311 = vshrl.u32 %v1279, 15
        %v1312 = vshrl.u32 %v1280, 15
        %v1313 = vshrl.u32 %v1281, 15
        %v1314 = vshrl.u32 %v1282, 15
        %v1315 = vshrl.u32 %v1283, 15
        %v1316 = vshrl.u32 %v1284, 15
        %v1317 = vshrl.u32 %v1285, 15
        %v1318 = vshrl.u32 %v1286, 15
        %v1319 = vshrl.u32 %v1287, 15
        %v1320 = vshrl.u32 %v1288, 15
        %v1321 = vshrl.u32 %v1289, 15
        %v1322 = vshrl.u32 %v1290, 15
        %v1323 = vshrl.u32 %v1291, 15
        %v1324 = vshrl.u32 %v1292, 15
        %v1325 = vshrl.u32 %v1293, 15
        %v1326 = vshrl.u32 %v1294, 15
        %v1327 = vshrl.u32 %v1295, 15
        %v1328 = vshrl.u32 %v1296, 15
        %v1329 = vshrl.u32 %v1297, 15
        %v1330 = vshrl.u32 %v1298, 15
        %v1331 = vshrl.u32 %v1299, 15
        %v1332 = vshrl.u32 %v1300, 15
        %v1333 = vshrl.u32 %v1301, 15
        %v1334 = vshrl.u32 %v1302, 15
        %v1335 = vshrl.u32 %v1303, 15
        %v1336 = vshrl.u32 %v1304, 15
        %v1337 = vshrl.u32 %v1305, 15
        %v1338 = vshrl.u32 %v1306, 15
        %v1339 = vshrl.u32 %v1307, 15
        %v1340 = vshrl.u32 %v1308, 15
        %v1341 = vxor.u32 %v1277, %v1309
        %v1342 = vxor.u32 %v1278, %v1310
        %v1343 = vxor.u32 %v1279, %v1311
        %v1344 = vxor.u32 %v1280, %v1312
        %v1345 = vxor.u32 %v1281, %v1313
        %v1346 = vxor.u32 %v1282, %v1314
        %v1347 = vxor.u32 %v1283, %v1315
        %v1348 = vxor.u32 %v1284, %v1316
        %v1349 = vxor.u32 %v1285, %v1317
        %v1350 = vxor.u32 %v1286, %v1318
        %v1351 = vxor.u32 %v1287, %v1319
        %v1352 = vxor.u32 %v1288, %v1320
        %v1353 = vxor.u32 %v1289, %v1321
        %v1354 = vxor.u32 %v1290, %v1322
        %v1355 = vxor.u32 %v1291, %v1323
        %v1356 = vxor.u32 %v1292, %v1324
        %v1357 = vxor.u32 %v1293, %v1325
        %v1358 = vxor.u32 %v1294, %v1326
        %v1359 = vxor.u32 %v1295, %v1327
        %v1360 = vxor.u32 %v1296, %v1328
        %v1361 = vxor.u32 %v1297, %v1329
        %v1362 = vxor.u32 %v1298, %v1330
        %v1363 = vxor.u32 %v1299, %v1331
        %v1364 = vxor.u32 %v1300, %v1332
        %v1365 = vxor.u32 %v1301, %v1333
        %v1366 = vxor.u32 %v1302, %v1334
        %v1367 = vxor.u32 %v1303, %v1335
        %v1368 = vxor.u32 %v1304, %v1336
        %v1369 = vxor.u32 %v1305, %v1337
        %v1370 = vxor.u32 %v1306, %v1338
        %v1371 = vxor.u32 %v1307, %v1339
        %v1372 = vxor.u32 %v1308, %v1340
        %v1373 = vmul.u32 %v1341, 2221713035
        %v1374 = vmul.u32 %v1342, 2221713035
        %v1375 = vmul.u32 %v1343, 2221713035
        %v1376 = vmul.u32 %v1344, 2221713035
        %v1377 = vmul.u32 %v1345, 2221713035
        %v1378 = vmul.u32 %v1346, 2221713035
        %v1379 = vmul.u32 %v1347, 2221713035
        %v1380 = vmul.u32 %v1348, 2221713035
        %v1381 = vmul.u32 %v1349, 2221713035
        %v1382 = vmul.u32 %v1350, 2221713035
        %v1383 = vmul.u32 %v1351, 2221713035
        %v1384 = vmul.u32 %v1352, 2221713035
        %v1385 = vmul.u32 %v1353, 2221713035
        %v1386 = vmul.u32 %v1354, 2221713035
        %v1387 = vmul.u32 %v1355, 2221713035
        %v1388 = vmul.u32 %v1356, 2221713035
        %v1389 = vmul.u32 %v1357, 2221713035
        %v1390 = vmul.u32 %v1358, 2221713035
        %v1391 = vmul.u32 %v1359, 2221713035
        %v1392 = vmul.u32 %v1360, 2221713035
        %v1393 = vmul.u32 %v1361, 2221713035
        %v1394 = vmul.u32 %v1362, 2221713035
        %v1395 = vmul.u32 %v1363, 2221713035
        %v1396 = vmul.u32 %v1364, 2221713035
        %v1397 = vmul.u32 %v1365, 2221713035
        %v1398 = vmul.u32 %v1366, 2221713035
        %v1399 = vmul.u32 %v1367, 2221713035
        %v1400 = vmul.u32 %v1368, 2221713035
        %v1401 = vmul.u32 %v1369, 2221713035
        %v1402 = vmul.u32 %v1370, 2221713035
        %v1403 = vmul.u32 %v1371, 2221713035
        %v1404 = vmul.u32 %v1372, 2221713035
        %v1405 = vshrl.u32 %v1373, 16
        %v1406 = vshrl.u32 %v1374, 16
        %v1407 = vshrl.u32 %v1375, 16
        %v1408 = vshrl.u32 %v1376, 16
        %v1409 = vshrl.u32 %v1377, 16
        %v1410 = vshrl.u32 %v1378, 16
        %v1411 = vshrl.u32 %v1379, 16
        %v1412 = vshrl.u32 %v1380, 16
        %v1413 = vshrl.u32 %v1381, 16
        %v1414 = vshrl.u32 %v1382, 16
        %v1415 = vshrl.u32 %v1383, 16
        %v1416 = vshrl.u32 %v1384, 16
        %v1417 = vshrl.u32 %v1385, 16
        %v1418 = vshrl.u32 %v1386, 16
        %v1419 = vshrl.u32 %v1387, 16
        %v1420 = vshrl.u32 %v1388, 16
        %v1421 = vshrl.u32 %v1389, 16
        %v1422 = vshrl.u32 %v1390, 16
        %v1423 = vshrl.u32 %v1391, 16
        %v1424 = vshrl.u32 %v1392, 16
        %v1425 = vshrl.u32 %v1393, 16
        %v1426 = vshrl.u32 %v1394, 16
        %v1427 = vshrl.u32 %v1395, 16
        %v1428 = vshrl.u32 %v1396, 16
        %v1429 = vshrl.u32 %v1397, 16
        %v1430 = vshrl.u32 %v1398, 16
        %v1431 = vshrl.u32 %v1399, 16
        %v1432 = vshrl.u32 %v1400, 16
        %v1433 = vshrl.u32 %v1401, 16
        %v1434 = vshrl.u32 %v1402, 16
        %v1435 = vshrl.u32 %v1403, 16
        %v1436 = vshrl.u32 %v1404, 16
        %v1437 = vxor.u32 %v1373, %v1405
        %v1438 = vxor.u32 %v1374, %v1406
        %v1439 = vxor.u32 %v1375, %v1407
        %v1440 = vxor.u32 %v1376, %v1408
        %v1441 = vxor.u32 %v1377, %v1409
        %v1442 = vxor.u32 %v1378, %v1410
        %v1443 = vxor.u32 %v1379, %v1411
        %v1444 = vxor.u32 %v1380, %v1412
        %v1445 = vxor.u32 %v1381, %v1413
        %v1446 = vxor.u32 %v1382, %v1414
        %v1447 = vxor.u32 %v1383, %v1415
        %v1448 = vxor.u32 %v1384, %v1416
        %v1449 = vxor.u32 %v1385, %v1417
        %v1450 = vxor.u32 %v1386, %v1418
        %v1451 = vxor.u32 %v1387, %v1419
        %v1452 = vxor.u32 %v1388, %v1420
        %v1453 = vxor.u32 %v1389, %v1421
        %v1454 = vxor.u32 %v1390, %v1422
        %v1455 = vxor.u32 %v1391, %v1423
        %v1456 = vxor.u32 %v1392, %v1424
        %v1457 = vxor.u32 %v1393, %v1425
        %v1458 = vxor.u32 %v1394, %v1426
        %v1459 = vxor.u32 %v1395, %v1427
        %v1460 = vxor.u32 %v1396, %v1428
        %v1461 = vxor.u32 %v1397, %v1429
        %v1462 = vxor.u32 %v1398, %v1430
        %v1463 = vxor.u32 %v1399, %v1431
        %v1464 = vxor.u32 %v1400, %v1432
        %v1465 = vxor.u32 %v1401, %v1433
        %v1466 = vxor.u32 %v1402, %v1434
        %v1467 = vxor.u32 %v1403, %v1435
        %v1468 = vxor.u32 %v1404, %v1436
        %v1469 = vshrl.u32 %v1437, 1
        %v1470 = vshrl.u32 %v1438, 1
        %v1471 = vshrl.u32 %v1439, 1
        %v1472 = vshrl.u32 %v1440, 1
        %v1473 = vshrl.u32 %v1441, 1
        %v1474 = vshrl.u32 %v1442, 1
        %v1475 = vshrl.u32 %v1443, 1
        %v1476 = vshrl.u32 %v1444, 1
        %v1477 = vshrl.u32 %v1445, 1
        %v1478 = vshrl.u32 %v1446, 1
        %v1479 = vshrl.u32 %v1447, 1
        %v1480 = vshrl.u32 %v1448, 1
        %v1481 = vshrl.u32 %v1449, 1
        %v1482 = vshrl.u32 %v1450, 1
        %v1483 = vshrl.u32 %v1451, 1
        %v1484 = vshrl.u32 %v1452, 1
        %v1485 = vshrl.u32 %v1453, 1
        %v1486 = vshrl.u32 %v1454, 1
        %v1487 = vshrl.u32 %v1455, 1
        %v1488 = vshrl.u32 %v1456, 1
        %v1489 = vshrl.u32 %v1457, 1
        %v1490 = vshrl.u32 %v1458, 1
        %v1491 = vshrl.u32 %v1459, 1
        %v1492 = vshrl.u32 %v1460, 1
        %v1493 = vshrl.u32 %v1461, 1
        %v1494 = vshrl.u32 %v1462, 1
        %v1495 = vshrl.u32 %v1463, 1
        %v1496 = vshrl.u32 %v1464, 1
        %v1497 = vshrl.u32 %v1465, 1
        %v1498 = vshrl.u32 %v1466, 1
        %v1499 = vshrl.u32 %v1467, 1
        %v1500 = vshrl.u32 %v1468, 1
        %v1501 = vadd.s32 %v1469, 2147483648
        %vm1503 = vcmp.lt.s32.totalorder %v1501, 3221225472
        %v1504 = vadd.s32 %v1470, 2147483648
        %vm1506 = vcmp.lt.s32.totalorder %v1504, 3221225472
        %v1507 = vadd.s32 %v1471, 2147483648
        %vm1509 = vcmp.lt.s32.totalorder %v1507, 3221225472
        %v1510 = vadd.s32 %v1472, 2147483648
        %vm1512 = vcmp.lt.s32.totalorder %v1510, 3221225472
        %v1513 = vadd.s32 %v1473, 2147483648
        %vm1515 = vcmp.lt.s32.totalorder %v1513, 3221225472
        %v1516 = vadd.s32 %v1474, 2147483648
        %vm1518 = vcmp.lt.s32.totalorder %v1516, 3221225472
        %v1519 = vadd.s32 %v1475, 2147483648
        %vm1521 = vcmp.lt.s32.totalorder %v1519, 3221225472
        %v1522 = vadd.s32 %v1476, 2147483648
        %vm1524 = vcmp.lt.s32.totalorder %v1522, 3221225472
        %v1525 = vadd.s32 %v1477, 2147483648
        %vm1527 = vcmp.lt.s32.totalorder %v1525, 3221225472
        %v1528 = vadd.s32 %v1478, 2147483648
        %vm1530 = vcmp.lt.s32.totalorder %v1528, 3221225472
        %v1531 = vadd.s32 %v1479, 2147483648
        %vm1533 = vcmp.lt.s32.totalorder %v1531, 3221225472
        %v1534 = vadd.s32 %v1480, 2147483648
        %vm1536 = vcmp.lt.s32.totalorder %v1534, 3221225472
        %v1537 = vadd.s32 %v1481, 2147483648
        %vm1539 = vcmp.lt.s32.totalorder %v1537, 3221225472
        %v1540 = vadd.s32 %v1482, 2147483648
        %vm1542 = vcmp.lt.s32.totalorder %v1540, 3221225472
        %v1543 = vadd.s32 %v1483, 2147483648
        %vm1545 = vcmp.lt.s32.totalorder %v1543, 3221225472
        %v1546 = vadd.s32 %v1484, 2147483648
        %vm1548 = vcmp.lt.s32.totalorder %v1546, 3221225472
        %v1549 = vadd.s32 %v1485, 2147483648
        %vm1551 = vcmp.lt.s32.totalorder %v1549, 3221225472
        %v1552 = vadd.s32 %v1486, 2147483648
        %vm1554 = vcmp.lt.s32.totalorder %v1552, 3221225472
        %v1555 = vadd.s32 %v1487, 2147483648
        %vm1557 = vcmp.lt.s32.totalorder %v1555, 3221225472
        %v1558 = vadd.s32 %v1488, 2147483648
        %vm1560 = vcmp.lt.s32.totalorder %v1558, 3221225472
        %v1561 = vadd.s32 %v1489, 2147483648
        %vm1563 = vcmp.lt.s32.totalorder %v1561, 3221225472
        %v1564 = vadd.s32 %v1490, 2147483648
        %vm1566 = vcmp.lt.s32.totalorder %v1564, 3221225472
        %v1567 = vadd.s32 %v1491, 2147483648
        %vm1569 = vcmp.lt.s32.totalorder %v1567, 3221225472
        %v1570 = vadd.s32 %v1492, 2147483648
        %vm1572 = vcmp.lt.s32.totalorder %v1570, 3221225472
        %v1573 = vadd.s32 %v1493, 2147483648
        %vm1575 = vcmp.lt.s32.totalorder %v1573, 3221225472
        %v1576 = vadd.s32 %v1494, 2147483648
        %vm1578 = vcmp.lt.s32.totalorder %v1576, 3221225472
        %v1579 = vadd.s32 %v1495, 2147483648
        %vm1581 = vcmp.lt.s32.totalorder %v1579, 3221225472
        %v1582 = vadd.s32 %v1496, 2147483648
        %vm1584 = vcmp.lt.s32.totalorder %v1582, 3221225472
        %v1585 = vadd.s32 %v1497, 2147483648
        %vm1587 = vcmp.lt.s32.totalorder %v1585, 3221225472
        %v1588 = vadd.s32 %v1498, 2147483648
        %vm1590 = vcmp.lt.s32.totalorder %v1588, 3221225472
        %v1591 = vadd.s32 %v1499, 2147483648
        %vm1593 = vcmp.lt.s32.totalorder %v1591, 3221225472
        %v1594 = vadd.s32 %v1500, 2147483648
        %vm1596 = vcmp.lt.s32.totalorder %v1594, 3221225472
        %v1597 = vmul.f32 %v1024, 2.0
        %v1598 = vmul.f32 %v1025, 2.0
        %v1599 = vmul.f32 %v1026, 2.0
        %v1600 = vmul.f32 %v1027, 2.0
        %v1601 = vmul.f32 %v1028, 2.0
        %v1602 = vmul.f32 %v1029, 2.0
        %v1603 = vmul.f32 %v1030, 2.0
        %v1604 = vmul.f32 %v1031, 2.0
        %v1605 = vmul.f32 %v1032, 2.0
        %v1606 = vmul.f32 %v1033, 2.0
        %v1607 = vmul.f32 %v1034, 2.0
        %v1608 = vmul.f32 %v1035, 2.0
        %v1609 = vmul.f32 %v1036, 2.0
        %v1610 = vmul.f32 %v1037, 2.0
        %v1611 = vmul.f32 %v1038, 2.0
        %v1612 = vmul.f32 %v1039, 2.0
        %v1613 = vmul.f32 %v1040, 2.0
        %v1614 = vmul.f32 %v1041, 2.0
        %v1615 = vmul.f32 %v1042, 2.0
        %v1616 = vmul.f32 %v1043, 2.0
        %v1617 = vmul.f32 %v1044, 2.0
        %v1618 = vmul.f32 %v1045, 2.0
        %v1619 = vmul.f32 %v1046, 2.0
        %v1620 = vmul.f32 %v1047, 2.0
        %v1621 = vmul.f32 %v1048, 2.0
        %v1622 = vmul.f32 %v1049, 2.0
        %v1623 = vmul.f32 %v1050, 2.0
        %v1624 = vmul.f32 %v1051, 2.0
        %v1625 = vmul.f32 %v1052, 2.0
        %v1626 = vmul.f32 %v1053, 2.0
        %v1627 = vmul.f32 %v1054, 2.0
        %v1628 = vmul.f32 %v1055, 2.0
        %v1629 = vsel %vm1503, %v1597, 0.0
        %v1630 = vsel %vm1506, %v1598, 0.0
        %v1631 = vsel %vm1509, %v1599, 0.0
        %v1632 = vsel %vm1512, %v1600, 0.0
        %v1633 = vsel %vm1515, %v1601, 0.0
        %v1634 = vsel %vm1518, %v1602, 0.0
        %v1635 = vsel %vm1521, %v1603, 0.0
        %v1636 = vsel %vm1524, %v1604, 0.0
        %v1637 = vsel %vm1527, %v1605, 0.0
        %v1638 = vsel %vm1530, %v1606, 0.0
        %v1639 = vsel %vm1533, %v1607, 0.0
        %v1640 = vsel %vm1536, %v1608, 0.0
        %v1641 = vsel %vm1539, %v1609, 0.0
        %v1642 = vsel %vm1542, %v1610, 0.0
        %v1643 = vsel %vm1545, %v1611, 0.0
        %v1644 = vsel %vm1548, %v1612, 0.0
        %v1645 = vsel %vm1551, %v1613, 0.0
        %v1646 = vsel %vm1554, %v1614, 0.0
        %v1647 = vsel %vm1557, %v1615, 0.0
        %v1648 = vsel %vm1560, %v1616, 0.0
        %v1649 = vsel %vm1563, %v1617, 0.0
        %v1650 = vsel %vm1566, %v1618, 0.0
        %v1651 = vsel %vm1569, %v1619, 0.0
        %v1652 = vsel %vm1572, %v1620, 0.0
        %v1653 = vsel %vm1575, %v1621, 0.0
        %v1654 = vsel %vm1578, %v1622, 0.0
        %v1655 = vsel %vm1581, %v1623, 0.0
        %v1656 = vsel %vm1584, %v1624, 0.0
        %v1657 = vsel %vm1587, %v1625, 0.0
        %v1658 = vsel %vm1590, %v1626, 0.0
        %v1659 = vsel %vm1593, %v1627, 0.0
        %v1660 = vsel %vm1596, %v1628, 0.0
        %v1661 = vld [vmem:[#allocation3] sm:$0xff]
        %v1662 = vld [vmem:[#allocation3 + $0x8] sm:$0xff]
        %v1663 = vld [vmem:[#allocation3 + $0x10] sm:$0xff]
        %v1664 = vld [vmem:[#allocation3 + $0x18] sm:$0xff]
        %v1665 = vld [vmem:[#allocation3 + $0x20] sm:$0xff]
        %v1666 = vld [vmem:[#allocation3 + $0x28] sm:$0xff]
        %v1667 = vld [vmem:[#allocation3 + $0x30] sm:$0xff]
        %v1668 = vld [vmem:[#allocation3 + $0x38] sm:$0xff]
        %v1669 = vld [vmem:[#allocation3 + $0x40] sm:$0xff]
        %v1670 = vld [vmem:[#allocation3 + $0x48] sm:$0xff]
        %v1671 = vld [vmem:[#allocation3 + $0x50] sm:$0xff]
        %v1672 = vld [vmem:[#allocation3 + $0x58] sm:$0xff]
        %v1673 = vld [vmem:[#allocation3 + $0x60] sm:$0xff]
        %v1674 = vld [vmem:[#allocation3 + $0x68] sm:$0xff]
        %v1675 = vld [vmem:[#allocation3 + $0x70] sm:$0xff]
        %v1676 = vld [vmem:[#allocation3 + $0x78] sm:$0xff]
        %v1677 = vunpack.c.l.bf16 %v599
        %v1678 = vunpack.c.l.bf16 %v600
        %v1679 = vunpack.c.l.bf16 %v601
        %v1680 = vunpack.c.l.bf16 %v602
        %v1681 = vunpack.c.l.bf16 %v603
        %v1682 = vunpack.c.l.bf16 %v604
        %v1683 = vunpack.c.l.bf16 %v605
        %v1684 = vunpack.c.l.bf16 %v606
        %v1685 = vunpack.c.l.bf16 %v607
        %v1686 = vunpack.c.l.bf16 %v608
        %v1687 = vunpack.c.l.bf16 %v609
        %v1688 = vunpack.c.l.bf16 %v610
        %v1689 = vunpack.c.l.bf16 %v611
        %v1690 = vunpack.c.l.bf16 %v612
        %v1691 = vunpack.c.l.bf16 %v613
        %v1692 = vunpack.c.l.bf16 %v614
        %v1693 = vunpack.c.l.bf16 %v615
        %v1694 = vunpack.c.l.bf16 %v616
        %v1695 = vunpack.c.l.bf16 %v617
        %v1696 = vunpack.c.l.bf16 %v618
        %v1697 = vunpack.c.l.bf16 %v619
        %v1698 = vunpack.c.l.bf16 %v620
        %v1699 = vunpack.c.l.bf16 %v621
        %v1700 = vunpack.c.l.bf16 %v622
        %v1701 = vunpack.c.l.bf16 %v623
        %v1702 = vunpack.c.l.bf16 %v624
        %v1703 = vunpack.c.l.bf16 %v625
        %v1704 = vunpack.c.l.bf16 %v626
        %v1705 = vunpack.c.l.bf16 %v627
        %v1706 = vunpack.c.l.bf16 %v628
        %v1707 = vunpack.c.l.bf16 %v629
        %v1708 = vunpack.c.l.bf16 %v630
        %v1709 = vmul.f32 %v1629, %v1677
        %v1710 = vmul.f32 %v1630, %v1678
        %v1711 = vmul.f32 %v1631, %v1679
        %v1712 = vmul.f32 %v1632, %v1680
        %v1713 = vmul.f32 %v1633, %v1681
        %v1714 = vmul.f32 %v1634, %v1682
        %v1715 = vmul.f32 %v1635, %v1683
        %v1716 = vmul.f32 %v1636, %v1684
        %v1717 = vmul.f32 %v1637, %v1685
        %v1718 = vmul.f32 %v1638, %v1686
        %v1719 = vmul.f32 %v1639, %v1687
        %v1720 = vmul.f32 %v1640, %v1688
        %v1721 = vmul.f32 %v1641, %v1689
        %v1722 = vmul.f32 %v1642, %v1690
        %v1723 = vmul.f32 %v1643, %v1691
        %v1724 = vmul.f32 %v1644, %v1692
        %v1725 = vmul.f32 %v1645, %v1693
        %v1726 = vmul.f32 %v1646, %v1694
        %v1727 = vmul.f32 %v1647, %v1695
        %v1728 = vmul.f32 %v1648, %v1696
        %v1729 = vmul.f32 %v1649, %v1697
        %v1730 = vmul.f32 %v1650, %v1698
        %v1731 = vmul.f32 %v1651, %v1699
        %v1732 = vmul.f32 %v1652, %v1700
        %v1733 = vmul.f32 %v1653, %v1701
        %v1734 = vmul.f32 %v1654, %v1702
        %v1735 = vmul.f32 %v1655, %v1703
        %v1736 = vmul.f32 %v1656, %v1704
        %v1737 = vmul.f32 %v1657, %v1705
        %v1738 = vmul.f32 %v1658, %v1706
        %v1739 = vmul.f32 %v1659, %v1707
        %v1740 = vmul.f32 %v1660, %v1708
        %v1741 = vadd.f32 %v1709, %v1725
        %v1742 = vadd.f32 %v1710, %v1726
        %v1743 = vadd.f32 %v1711, %v1727
        %v1744 = vadd.f32 %v1712, %v1728
        %v1745 = vadd.f32 %v1713, %v1729
        %v1746 = vadd.f32 %v1714, %v1730
        %v1747 = vadd.f32 %v1715, %v1731
        %v1748 = vadd.f32 %v1716, %v1732
        %v1749 = vadd.f32 %v1717, %v1733
        %v1750 = vadd.f32 %v1718, %v1734
        %v1751 = vadd.f32 %v1719, %v1735
        %v1752 = vadd.f32 %v1720, %v1736
        %v1753 = vadd.f32 %v1721, %v1737
        %v1754 = vadd.f32 %v1722, %v1738
        %v1755 = vadd.f32 %v1723, %v1739
        %v1756 = vadd.f32 %v1724, %v1740
        %v1757 = vadd.f32 %v1661, %v1741
        %v1758 = vadd.f32 %v1662, %v1742
        %v1759 = vadd.f32 %v1663, %v1743
        %v1760 = vadd.f32 %v1664, %v1744
        %v1761 = vadd.f32 %v1665, %v1745
        %v1762 = vadd.f32 %v1666, %v1746
        %v1763 = vadd.f32 %v1667, %v1747
        %v1764 = vadd.f32 %v1668, %v1748
        %v1765 = vadd.f32 %v1669, %v1749
        %v1766 = vadd.f32 %v1670, %v1750
        %v1767 = vadd.f32 %v1671, %v1751
        %v1768 = vadd.f32 %v1672, %v1752
        %v1769 = vadd.f32 %v1673, %v1753
        %v1770 = vadd.f32 %v1674, %v1754
        %v1771 = vadd.f32 %v1675, %v1755
        %v1772 = vadd.f32 %v1676, %v1756
        %1773 = vst [vmem:[#allocation3] sm:$0xff] %v1757
        %1774 = vst [vmem:[#allocation3 + $0x8] sm:$0xff] %v1758
        %1775 = vst [vmem:[#allocation3 + $0x10] sm:$0xff] %v1759
        %1776 = vst [vmem:[#allocation3 + $0x18] sm:$0xff] %v1760
        %1777 = vst [vmem:[#allocation3 + $0x20] sm:$0xff] %v1761
        %1778 = vst [vmem:[#allocation3 + $0x28] sm:$0xff] %v1762
        %1779 = vst [vmem:[#allocation3 + $0x30] sm:$0xff] %v1763
        %1780 = vst [vmem:[#allocation3 + $0x38] sm:$0xff] %v1764
        %1781 = vst [vmem:[#allocation3 + $0x40] sm:$0xff] %v1765
        %1782 = vst [vmem:[#allocation3 + $0x48] sm:$0xff] %v1766
        %1783 = vst [vmem:[#allocation3 + $0x50] sm:$0xff] %v1767
        %1784 = vst [vmem:[#allocation3 + $0x58] sm:$0xff] %v1768
        %1785 = vst [vmem:[#allocation3 + $0x60] sm:$0xff] %v1769
        %1786 = vst [vmem:[#allocation3 + $0x68] sm:$0xff] %v1770
        %1787 = vst [vmem:[#allocation3 + $0x70] sm:$0xff] %v1771
        %1788 = vst [vmem:[#allocation3 + $0x78] sm:$0xff] %v1772
        %p1789 = scmp.eq.s32.totalorder %s33, 2
        // Predicated region
        $region69: #{tpu_custom_call.1} parent=43 // pred_check
          %p1790 = pneg %p1789
        $region70: #{tpu_custom_call.1} parent=43 // pred_check_branch
          %1792 = sbr.rel (%p1790) target = $region72
        $region71: #{tpu_custom_call.1} parent=43 // pred_region
          %v1793 = vld [vmem:[#allocation3] sm:$0xff]
          %v1794 = vld [vmem:[#allocation3 + $0x8] sm:$0xff]
          %v1795 = vld [vmem:[#allocation3 + $0x10] sm:$0xff]
          %v1796 = vld [vmem:[#allocation3 + $0x18] sm:$0xff]
          %v1797 = vld [vmem:[#allocation3 + $0x20] sm:$0xff]
          %v1798 = vld [vmem:[#allocation3 + $0x28] sm:$0xff]
          %v1799 = vld [vmem:[#allocation3 + $0x30] sm:$0xff]
          %v1800 = vld [vmem:[#allocation3 + $0x38] sm:$0xff]
          %v1801 = vld [vmem:[#allocation3 + $0x40] sm:$0xff]
          %v1802 = vld [vmem:[#allocation3 + $0x48] sm:$0xff]
          %v1803 = vld [vmem:[#allocation3 + $0x50] sm:$0xff]
          %v1804 = vld [vmem:[#allocation3 + $0x58] sm:$0xff]
          %v1805 = vld [vmem:[#allocation3 + $0x60] sm:$0xff]
          %v1806 = vld [vmem:[#allocation3 + $0x68] sm:$0xff]
          %v1807 = vld [vmem:[#allocation3 + $0x70] sm:$0xff]
          %v1808 = vld [vmem:[#allocation3 + $0x78] sm:$0xff]
          %v1809 = vpack.c.bf16 %v1794, %v1793
          %v1810 = vpack.c.bf16 %v1796, %v1795
          %v1811 = vpack.c.bf16 %v1798, %v1797
          %v1812 = vpack.c.bf16 %v1800, %v1799
          %v1813 = vpack.c.bf16 %v1802, %v1801
          %v1814 = vpack.c.bf16 %v1804, %v1803
          %v1815 = vpack.c.bf16 %v1806, %v1805
          %v1816 = vpack.c.bf16 %v1808, %v1807
          %v1817 = vld [vmem:[#allocation13] sm:$0xf]
          %v1818 = vld [vmem:[#allocation13 + $0x4] sm:$0xf]
          %v1819 = vld [vmem:[#allocation13 + $0x8] sm:$0xf]
          %v1820 = vld [vmem:[#allocation13 + $0xc] sm:$0xf]
          %v1821 = vld [vmem:[#allocation13 + $0x10] sm:$0xf]
          %v1822 = vld [vmem:[#allocation13 + $0x14] sm:$0xf]
          %v1823 = vld [vmem:[#allocation13 + $0x18] sm:$0xf]
          %v1824 = vld [vmem:[#allocation13 + $0x1c] sm:$0xf]
          %v1825 = vld [vmem:[#allocation13 + $0x20] sm:$0xf]
          %v1826 = vld [vmem:[#allocation13 + $0x24] sm:$0xf]
          %v1827 = vld [vmem:[#allocation13 + $0x28] sm:$0xf]
          %v1828 = vld [vmem:[#allocation13 + $0x2c] sm:$0xf]
          %v1829 = vld [vmem:[#allocation13 + $0x30] sm:$0xf]
          %v1830 = vld [vmem:[#allocation13 + $0x34] sm:$0xf]
          %v1831 = vld [vmem:[#allocation13 + $0x38] sm:$0xf]
          %v1832 = vld [vmem:[#allocation13 + $0x3c] sm:$0xf]
          %v1849 = vunpack.c.l.b16 %v1817
          %v1850 = vunpack.c.l.b16 %v1818
          %v1851 = vunpack.c.l.b16 %v1819
          %v1852 = vunpack.c.l.b16 %v1820
          %v1853 = vunpack.c.l.b16 %v1821
          %v1854 = vunpack.c.l.b16 %v1822
          %v1855 = vunpack.c.l.b16 %v1823
          %v1856 = vunpack.c.l.b16 %v1824
          %v1857 = vunpack.c.l.b16 %v1825
          %v1858 = vunpack.c.l.b16 %v1826
          %v1859 = vunpack.c.l.b16 %v1827
          %v1860 = vunpack.c.l.b16 %v1828
          %v1861 = vunpack.c.l.b16 %v1829
          %v1862 = vunpack.c.l.b16 %v1830
          %v1863 = vunpack.c.l.b16 %v1831
          %v1864 = vunpack.c.l.b16 %v1832
          %v1865 = vpack.c.b16 %v1850, %v1849
          %v1866 = vpack.c.b16 %v1852, %v1851
          %v1867 = vpack.c.b16 %v1854, %v1853
          %v1868 = vpack.c.b16 %v1856, %v1855
          %v1869 = vpack.c.b16 %v1858, %v1857
          %v1870 = vpack.c.b16 %v1860, %v1859
          %v1871 = vpack.c.b16 %v1862, %v1861
          %v1872 = vpack.c.b16 %v1864, %v1863
          %1881 = vmatpush.bf16.msra.mxu0 %v1872
          %1882 = vmatpush.bf16.msra.mxu0 %v1871
          %1883 = vmatpush.bf16.msra.mxu0 %v1870
          %1884 = vmatpush.bf16.msra.mxu0 %v1869
          %1885 = vmatpush.bf16.msra.mxu0 %v1868
          %1886 = vmatpush.bf16.msra.mxu0 %v1867
          %1887 = vmatpush.bf16.msra.mxu0 %v1866
          %1888 = vmatpush.bf16.msra.mxu0 %v1865
          %1889 = vmatmul.bf16.gmra.mxu0 %v1809
          %v1890 = vpop.f32.mrf.mxu0
          %v1891 = vadd.f32 0.0, %v1890
          %v1892 = vpop.f32.mrf.mxu0
          %v1893 = vadd.f32 0.0, %v1892
          %1894 = vmatmul.bf16.gmra.mxu0 %v1810
          %v1895 = vpop.f32.mrf.mxu0
          %v1896 = vadd.f32 0.0, %v1895
          %v1897 = vpop.f32.mrf.mxu0
          %v1898 = vadd.f32 0.0, %v1897
          %1899 = vmatmul.bf16.gmra.mxu0 %v1811
          %v1900 = vpop.f32.mrf.mxu0
          %v1901 = vadd.f32 0.0, %v1900
          %v1902 = vpop.f32.mrf.mxu0
          %v1903 = vadd.f32 0.0, %v1902
          %1904 = vmatmul.bf16.gmra.mxu0 %v1812
          %v1905 = vpop.f32.mrf.mxu0
          %v1906 = vadd.f32 0.0, %v1905
          %v1907 = vpop.f32.mrf.mxu0
          %v1908 = vadd.f32 0.0, %v1907
          %1909 = vmatmul.bf16.gmra.mxu0 %v1813
          %v1910 = vpop.f32.mrf.mxu0
          %v1911 = vadd.f32 0.0, %v1910
          %v1912 = vpop.f32.mrf.mxu0
          %v1913 = vadd.f32 0.0, %v1912
          %1914 = vmatmul.bf16.gmra.mxu0 %v1814
          %v1915 = vpop.f32.mrf.mxu0
          %v1916 = vadd.f32 0.0, %v1915
          %v1917 = vpop.f32.mrf.mxu0
          %v1918 = vadd.f32 0.0, %v1917
          %1919 = vmatmul.bf16.gmra.mxu0 %v1815
          %v1920 = vpop.f32.mrf.mxu0
          %v1921 = vadd.f32 0.0, %v1920
          %v1922 = vpop.f32.mrf.mxu0
          %v1923 = vadd.f32 0.0, %v1922
          %1924 = vmatmul.bf16.gmra.mxu0 %v1816
          %v1925 = vpop.f32.mrf.mxu0
          %v1926 = vadd.f32 0.0, %v1925
          %v1927 = vpop.f32.mrf.mxu0
          %v1928 = vadd.f32 0.0, %v1927
          %1929 = vdwg.mxu0
          %v1930 = vpack.c.bf16 %v1891, %v1891
          %v1931 = vpack.c.bf16 %v1893, %v1893
          %v1932 = vpack.c.bf16 %v1896, %v1896
          %v1933 = vpack.c.bf16 %v1898, %v1898
          %v1934 = vpack.c.bf16 %v1901, %v1901
          %v1935 = vpack.c.bf16 %v1903, %v1903
          %v1936 = vpack.c.bf16 %v1906, %v1906
          %v1937 = vpack.c.bf16 %v1908, %v1908
          %v1938 = vpack.c.bf16 %v1911, %v1911
          %v1939 = vpack.c.bf16 %v1913, %v1913
          %v1940 = vpack.c.bf16 %v1916, %v1916
          %v1941 = vpack.c.bf16 %v1918, %v1918
          %v1942 = vpack.c.bf16 %v1921, %v1921
          %v1943 = vpack.c.bf16 %v1923, %v1923
          %v1944 = vpack.c.bf16 %v1926, %v1926
          %v1945 = vpack.c.bf16 %v1928, %v1928
          %1946 = vst [vmem:[%s405] sm:$0xf] %v1930
          %1947 = vst [vmem:[%s405 + $0x4] sm:$0xf] %v1931
          %1948 = vst [vmem:[%s405 + $0x8] sm:$0xf] %v1932
          %1949 = vst [vmem:[%s405 + $0xc] sm:$0xf] %v1933
          %1950 = vst [vmem:[%s405 + $0x10] sm:$0xf] %v1934
          %1951 = vst [vmem:[%s405 + $0x14] sm:$0xf] %v1935
          %1952 = vst [vmem:[%s405 + $0x18] sm:$0xf] %v1936
          %1953 = vst [vmem:[%s405 + $0x1c] sm:$0xf] %v1937
          %1954 = vst [vmem:[%s405 + $0x20] sm:$0xf] %v1938
          %1955 = vst [vmem:[%s405 + $0x24] sm:$0xf] %v1939
          %1956 = vst [vmem:[%s405 + $0x28] sm:$0xf] %v1940
          %1957 = vst [vmem:[%s405 + $0x2c] sm:$0xf] %v1941
          %1958 = vst [vmem:[%s405 + $0x30] sm:$0xf] %v1942
          %1959 = vst [vmem:[%s405 + $0x34] sm:$0xf] %v1943
          %1960 = vst [vmem:[%s405 + $0x38] sm:$0xf] %v1944
          %1961 = vst [vmem:[%s405 + $0x3c] sm:$0xf] %v1945
        $region72: #{tpu_custom_call.1} parent=43 // pred_fallthru
          _
        %s1962 = sand.u32 %s186, 1
        %s1963 = scalar_lea.sflag [#allocation7], %s1962
        %s1964 = sand.u32 %s186, 1
        %s1965 = smul.addr %s1964, 64
        %s1966 = scalar_lea.vmem [#allocation14], %s1965
        // Predicated region
        $region73: #{tpu_custom_call.1} parent=43 // pred_check
          %p1967 = pneg %p196
        $region74: #{tpu_custom_call.1} parent=43 // pred_check_branch
          %1969 = sbr.rel (%p1967) target = $region76
        $region75: #{tpu_custom_call.1} parent=43 // pred_region
          %s1970 = smul.u32 16, %s32
          %1972 = vsyncadd %s1963, 0
          %s1973 = smul.addr %s1970, 4
          %s1974 = scalar_lea.hbm %s6, %s1973
          %s1975 = sshll.u32 %s1966, 4
          %s1976 = int_to_ptr.vmem [resolvable:$true] %s1975
          %s1977 = sshll.u32 %s1974, 4
          %s1978 = int_to_ptr.hbm [resolvable:$true] %s1977
          %1983 = dma.vmem_to_hbm [thread:$0]  %s1976, 1024, %s1978, %s1963, 64, 64, 4
        $region76: #{tpu_custom_call.1} parent=43 // pred_fallthru
          _
      $region44: #{tpu_custom_call.1} parent=5 // pred_fallthru
        _
      %p1984 = scmp.le.s32.totalorder 2, %s23
      // Predicated region
      $region77: #{tpu_custom_call.1} parent=5 // pred_check
        %p1985 = pneg %p1984
      $region78: #{tpu_custom_call.1} parent=5 // pred_check_branch
        %1987 = sbr.rel (%p1985) target = $region80
      $region79: #{tpu_custom_call.1} parent=5 // pred_region
        %s1988 = ssub.s32 %s23, 2
        // Predicated region
        $region81: #{tpu_custom_call.1} parent=79 // pred_check
          %p1989 = pneg %p202
        $region82: #{tpu_custom_call.1} parent=79 // pred_check_branch
          %1991 = sbr.rel (%p1989) target = $region84
        $region83: #{tpu_custom_call.1} parent=79 // pred_region
          %s1992 = sand.u32 %s187, 1
          %s1993 = scalar_lea.sflag [#allocation7], %s1992
          %s1994 = sand.u32 %s187, 1
          %s1995 = smul.addr %s1994, 64
          %s1996 = scalar_lea.vmem [#allocation14], %s1995
          %1998 = dma.done %s1993, 1024
        $region84: #{tpu_custom_call.1} parent=79 // pred_fallthru
          _
      $region80: #{tpu_custom_call.1} parent=5 // pred_fallthru
        _
    $region6: #{tpu_custom_call.1} parent=1 // loop_footer
      %s27 = sadd.s32 1, %s23
    $region7: #{tpu_custom_call.1} parent=1 // loop_footer_branch
      %22 = sbr.rel target = $region3
    $region8: #{tpu_custom_call.1} parent=1 // loop_exit
      _
    %1999 = vsyncpa [#allocation6], 1
    %s2000 = scalar_lea.sflag [#allocation6], 1
    %2001 = vsyncpa %s2000, 1
    %2002 = vsyncpa [#allocation9], 1
    %s2003 = scalar_lea.sflag [#allocation9], 1
    %2004 = vsyncpa %s2003, 1
    %2005 = vsyncpa [#allocation12], 1
    %2006 = vsyncpa [#allocation7], 1
    %s2007 = scalar_lea.sflag [#allocation7], 1
    %2008 = vsyncpa %s2007, 1

</llo_original>
